<compile_context>
chip_gen: v6e
topology: v6e:2x2x1
jax: 0.10.0
libtpu: 0.0.40
codegen_flags: <defaults>
</compile_context>

<pallas_src>
import jax
import jax.numpy as jnp
from jax import lax
from jax.experimental import pallas as pl
from jax.experimental.pallas import tpu as pltpu

# ----------------------------------------------------------------------------
# Small, forward-consistent hyperparameters
# ----------------------------------------------------------------------------
NUM_CHUNKS = 8            # x.size(0) -> sequence length for the transformer
C, H, W = 4, 16, 16       # per-chunk "image" fed to the base model
FLAT = C * H * W          # 1024
D_MODEL = 32              # chunk_feat_dim
N_HEADS = 4               # num_attn_heads (must divide D_MODEL)
HEAD_DIM = D_MODEL // N_HEADS
FFN_DIM = 64              # dim_feedforward
N_LAYERS = 2              # num_layers
NUM_TASKS = 1
EPS = 1e-5                # LayerNorm eps (PyTorch default)
LANES = 128

_VMEM = pl.BlockSpec(memory_space=pltpu.MemorySpace.VMEM)


# ----------------------------------------------------------------------------
# Slab layout: every small tensor lives at a static, sublane-aligned row
# offset of a single (rows, 128) f32 buffer.
# ----------------------------------------------------------------------------
def _slab_layout():
    entries = [
        ("base_b", (1, D_MODEL)),
        ("cls_w", (NUM_TASKS, D_MODEL)),          # PyTorch (out, in) row layout
        ("cls_b", (1, NUM_TASKS)),
        ("blockdiag", (D_MODEL, D_MODEL)),        # same-head mask constant
    ]
    for l in range(N_LAYERS):
        entries += [
            (f"in_w_{l}", (D_MODEL, 3 * D_MODEL)),
            (f"in_b_{l}", (1, 3 * D_MODEL)),
            (f"out_w_{l}", (D_MODEL, D_MODEL)),
            (f"out_b_{l}", (1, D_MODEL)),
            (f"ln1_w_{l}", (1, D_MODEL)),
            (f"ln1_b_{l}", (1, D_MODEL)),
            (f"ff1_w_{l}", (D_MODEL, FFN_DIM)),
            (f"ff1_b_{l}", (1, FFN_DIM)),
            (f"ff2_w_{l}", (FFN_DIM, D_MODEL)),
            (f"ff2_b_{l}", (1, D_MODEL)),
            (f"ln2_w_{l}", (1, D_MODEL)),
            (f"ln2_b_{l}", (1, D_MODEL)),
        ]
    offsets, row = {}, 0
    for name, shape in entries:
        offsets[name] = (row, shape)
        row += ((shape[0] + 7) // 8) * 8          # sublane-align every entry
    return offsets, row


_SLAB_OFFSETS, _SLAB_ROWS = _slab_layout()


# ----------------------------------------------------------------------------
# Fused kernel: base projection -> 2-layer post-LN transformer encoder (relu,
# batch_first, batch=1, dropout=identity) -> mean pool -> classifier head.
# ----------------------------------------------------------------------------
def _fused_kernel(x_ref, base_w_ref, slab_ref, o_ref):
    def slab(name):
        row, (r, c) = _SLAB_OFFSETS[name]
        return slab_ref[row:row + r, 0:c]          # static window load

    def layer_norm(v, w, b):
        mu = jnp.mean(v, axis=-1, keepdims=True)
        var = jnp.mean((v - mu) ** 2, axis=-1, keepdims=True)
        return (v - mu) * lax.rsqrt(var + EPS) * w + b

    # ---- base-model stand-in: bf16 operands, f32 accumulation -> (S, D) ----
    x = (jnp.dot(x_ref[...], base_w_ref[...], preferred_element_type=jnp.float32)
         + slab("base_b"))

    blockdiag = slab("blockdiag")                  # (D, D): 1 iff same head

    for l in range(N_LAYERS):                      # static, unrolled
        # ---- multi-head self-attention (heads packed along lanes) ----
        qkv = (jnp.dot(x, slab(f"in_w_{l}"), preferred_element_type=jnp.float32)
               + slab(f"in_b_{l}"))                # (S, 3D)
        q = qkv[:, 0 * D_MODEL:1 * D_MODEL]        # 1/sqrt(head_dim) folded on host
        k = qkv[:, 1 * D_MODEL:2 * D_MODEL]
        v = qkv[:, 2 * D_MODEL:3 * D_MODEL]

        # Block-diagonal head packing (sublane concat + constant mask):
        #   K_bd[h*HD + j, h*HD + d] = k[j, h*HD + d]   (0 off-diagonal)
        k_bd = jnp.concatenate([k] * N_HEADS, axis=0) * blockdiag   # (D, D)
        v_bd = jnp.concatenate([v] * N_HEADS, axis=0) * blockdiag   # (D, D)

        # scores[i, h*HD + j] = <q_h[i], k_h[j]>  -- one matmul for all heads
        s = lax.dot_general(q, k_bd, (((1,), (1,)), ((), ())),
                            preferred_element_type=jnp.float32)     # (S, D)
        # row-global max is constant within each head group -> exact softmax
        s = s - jnp.max(s, axis=-1, keepdims=True)
        p = jnp.exp(s)
        # per-head denominator broadcast back to its 8 lanes via the same mask
        denom = jnp.dot(p, blockdiag, preferred_element_type=jnp.float32)
        p = p * pl.reciprocal(denom, approx=True)
        # ctx[i, h*HD + d] = sum_j p[i, h*HD + j] * v[j, h*HD + d]
        ctx = jnp.dot(p, v_bd, preferred_element_type=jnp.float32)  # (S, D)

        attn = (jnp.dot(ctx, slab(f"out_w_{l}"), preferred_element_type=jnp.float32)
                + slab(f"out_b_{l}"))
        # post-LN residual 1 (dropout == identity)
        x = layer_norm(x + attn, slab(f"ln1_w_{l}"), slab(f"ln1_b_{l}"))

        # ---- feed-forward: linear -> relu -> linear ----
        ff = jnp.maximum(
            jnp.dot(x, slab(f"ff1_w_{l}"), preferred_element_type=jnp.float32)
            + slab(f"ff1_b_{l}"), 0.0)
        ff = (jnp.dot(ff, slab(f"ff2_w_{l}"), preferred_element_type=jnp.float32)
              + slab(f"ff2_b_{l}"))
        # post-LN residual 2
        x = layer_norm(x + ff, slab(f"ln2_w_{l}"), slab(f"ln2_b_{l}"))

    # ---- mean pool over chunks + classifier (VPU multiply + lane reduce) ----
    pooled = jnp.mean(x, axis=0, keepdims=True)                     # (1, D)
    # NUM_TASKS == 1: out = pooled . cls_w + cls_b
    out = jnp.sum(pooled * slab("cls_w"), axis=-1, keepdims=True) + slab("cls_b")
    # lane-dense padded store; caller slices [0:1, 0:NUM_TASKS]
    o_ref[...] = jnp.broadcast_to(out, o_ref.shape)


def _fused_forward(x_flat, packed):
    out_padded = pl.pallas_call(
        _fused_kernel,
        out_shape=jax.ShapeDtypeStruct((8, LANES), jnp.float32),
        in_specs=[_VMEM, _VMEM, _VMEM],
        out_specs=_VMEM,
    )(x_flat, packed["base_w"], packed["slab"])
    return out_padded[0:1, 0:NUM_TASKS]


# ----------------------------------------------------------------------------
# Deterministic parameter construction (synthetic, not a checkpoint load).
# Matrices are stored PRE-TRANSPOSED (x @ W layout) so the kernel never
# transposes.
# ----------------------------------------------------------------------------
def make_params(key):
    ks = jax.random.split(key, 12)
    s = 0.05
    f32 = jnp.float32
    return {
        "base_w": s * jax.random.normal(ks[0], (FLAT, D_MODEL), f32),
        "base_b": s * jax.random.normal(ks[1], (1, D_MODEL), f32),
        "in_w":  s * jax.random.normal(ks[2], (N_LAYERS, D_MODEL, 3 * D_MODEL), f32),
        "in_b":  s * jax.random.normal(ks[3], (N_LAYERS, 1, 3 * D_MODEL), f32),
        "out_w": s * jax.random.normal(ks[4], (N_LAYERS, D_MODEL, D_MODEL), f32),
        "out_b": s * jax.random.normal(ks[5], (N_LAYERS, 1, D_MODEL), f32),
        "ln1_w": jnp.ones((N_LAYERS, 1, D_MODEL), f32),
        "ln1_b": jnp.zeros((N_LAYERS, 1, D_MODEL), f32),
        "ln2_w": jnp.ones((N_LAYERS, 1, D_MODEL), f32),
        "ln2_b": jnp.zeros((N_LAYERS, 1, D_MODEL), f32),
        "ff1_w": s * jax.random.normal(ks[6], (N_LAYERS, D_MODEL, FFN_DIM), f32),
        "ff1_b": s * jax.random.normal(ks[7], (N_LAYERS, 1, FFN_DIM), f32),
        "ff2_w": s * jax.random.normal(ks[8], (N_LAYERS, FFN_DIM, D_MODEL), f32),
        "ff2_b": s * jax.random.normal(ks[9], (N_LAYERS, 1, D_MODEL), f32),
        "cls_w": s * jax.random.normal(ks[10], (NUM_TASKS, D_MODEL), f32),
        "cls_b": s * jax.random.normal(ks[11], (1, NUM_TASKS), f32),
    }


def pack_params(params):
    """Pack all small tensors into one (rows, 128) f32 slab; base_w -> bf16."""
    slab = jnp.zeros((_SLAB_ROWS, LANES), jnp.float32)

    def put(sl, name, val):
        row, (r, c) = _SLAB_OFFSETS[name]
        return sl.at[row:row + r, 0:c].set(val.astype(jnp.float32))

    scale = 1.0 / float(HEAD_DIM) ** 0.5
    slab = put(slab, "base_b", params["base_b"])
    slab = put(slab, "cls_w", params["cls_w"])
    slab = put(slab, "cls_b", params["cls_b"])
    idx = jnp.arange(D_MODEL)
    blockdiag = (idx[:, None] // HEAD_DIM == idx[None, :] // HEAD_DIM).astype(jnp.float32)
    slab = put(slab, "blockdiag", blockdiag)

    for l in range(N_LAYERS):
        in_w = params["in_w"][l]
        in_b = params["in_b"][l]
        # fold 1/sqrt(head_dim) into the q columns (weight + bias)
        in_w = in_w.at[:, 0:D_MODEL].multiply(scale)
        in_b = in_b.at[:, 0:D_MODEL].multiply(scale)
        slab = put(slab, f"in_w_{l}", in_w)
        slab = put(slab, f"in_b_{l}", in_b)
        slab = put(slab, f"out_w_{l}", params["out_w"][l])
        slab = put(slab, f"out_b_{l}", params["out_b"][l])
        slab = put(slab, f"ln1_w_{l}", params["ln1_w"][l])
        slab = put(slab, f"ln1_b_{l}", params["ln1_b"][l])
        slab = put(slab, f"ff1_w_{l}", params["ff1_w"][l])
        slab = put(slab, f"ff1_b_{l}", params["ff1_b"][l])
        slab = put(slab, f"ff2_w_{l}", params["ff2_w"][l])
        slab = put(slab, f"ff2_b_{l}", params["ff2_b"][l])
        slab = put(slab, f"ln2_w_{l}", params["ln2_w"][l])
        slab = put(slab, f"ln2_b_{l}", params["ln2_b"][l])

    return {
        "slab": slab,
        # bf16 DMA + bf16 MXU operands; accumulation stays f32 in the kernel.
        "base_w": params["base_w"].astype(jnp.bfloat16),
    }


# ----------------------------------------------------------------------------
# Full forward, mirroring CombinedModel.forward (single fused pallas_call)
# ----------------------------------------------------------------------------
@jax.jit
def combined_model_forward(x, packed):
    x_flat = x.reshape(NUM_CHUNKS, FLAT).astype(jnp.bfloat16)
    return _fused_forward(x_flat, packed)            # (1, num_tasks)


if __name__ == "__main__":
    key = jax.random.PRNGKey(0)
    k_x, k_p = jax.random.split(key)
    x = jax.random.normal(k_x, (NUM_CHUNKS, C, H, W), jnp.float32)
    packed = pack_params(make_params(k_p))

    out = combined_model_forward(x, packed)
    out = jax.block_until_ready(out)
    assert out.shape == (1, NUM_TASKS)
    assert bool(jnp.all(jnp.isfinite(out)))
    print("KERNEL_OK")
</pallas_src>

<mosaic_0001>
module attributes {stable_mosaic.version = 11 : i64} {
  func.func @_fused_kernel(%arg0: memref<8x1024xbf16, #tpu.memory_space<vmem>>, %arg1: memref<1024x32xbf16, #tpu.memory_space<vmem>>, %arg2: memref<504x128xf32, #tpu.memory_space<vmem>>, %arg3: memref<8x128xf32, #tpu.memory_space<vmem>>) attributes {dimension_semantics = [], scalar_prefetch = 0 : i64, scratch_operands = 0 : i64, tpu.core_type = #tpu.core_type<tc>} {
    %c0 = arith.constant 0 : index
    %c0_0 = arith.constant 0 : index
    %0 = vector.load %arg0[%c0, %c0_0] : memref<8x1024xbf16, #tpu.memory_space<vmem>>, vector<8x1024xbf16>
    %c0_1 = arith.constant 0 : index
    %c0_2 = arith.constant 0 : index
    %1 = vector.load %arg1[%c0_1, %c0_2] : memref<1024x32xbf16, #tpu.memory_space<vmem>>, vector<1024x32xbf16>
    %cst = arith.constant dense<0.000000e+00> : vector<8x32xf32>
    %2 = tpu.matmul %0, %1, %cst {dimension_numbers = #tpu.dot_dimension_numbers<[1], [0], [0], [1], [0, 0, 1, 1], [], []>} : vector<8x1024xbf16>, vector<1024x32xbf16>, vector<8x32xf32> -> vector<8x32xf32>
    %c0_3 = arith.constant 0 : index
    %c0_4 = arith.constant 0 : index
    %3 = vector.load %arg2[%c0_3, %c0_4] : memref<504x128xf32, #tpu.memory_space<vmem>>, vector<1x32xf32>
    %4 = vector.broadcast %3 : vector<1x32xf32> to vector<8x32xf32>
    %5 = arith.addf %2, %4 : vector<8x32xf32>
    %c24 = arith.constant 24 : index
    %c0_5 = arith.constant 0 : index
    %6 = vector.load %arg2[%c24, %c0_5] : memref<504x128xf32, #tpu.memory_space<vmem>>, vector<32x32xf32>
    %c56 = arith.constant 56 : index
    %c0_6 = arith.constant 0 : index
    %7 = vector.load %arg2[%c56, %c0_6] : memref<504x128xf32, #tpu.memory_space<vmem>>, vector<32x96xf32>
    %cst_7 = arith.constant dense<0.000000e+00> : vector<8x96xf32>
    %8 = tpu.matmul %5, %7, %cst_7 {dimension_numbers = #tpu.dot_dimension_numbers<[1], [0], [0], [1], [0, 0, 1, 1], [], []>} : vector<8x32xf32>, vector<32x96xf32>, vector<8x96xf32> -> vector<8x96xf32>
    %c88 = arith.constant 88 : index
    %c0_8 = arith.constant 0 : index
    %9 = vector.load %arg2[%c88, %c0_8] : memref<504x128xf32, #tpu.memory_space<vmem>>, vector<1x96xf32>
    %10 = vector.broadcast %9 : vector<1x96xf32> to vector<8x96xf32>
    %11 = arith.addf %8, %10 : vector<8x96xf32>
    %12 = vector.extract_strided_slice %11 {offsets = [0, 0], sizes = [8, 32], strides = [1, 1]} : vector<8x96xf32> to vector<8x32xf32>
    %13 = vector.extract_strided_slice %11 {offsets = [0, 32], sizes = [8, 32], strides = [1, 1]} : vector<8x96xf32> to vector<8x32xf32>
    %14 = vector.extract_strided_slice %11 {offsets = [0, 64], sizes = [8, 32], strides = [1, 1]} : vector<8x96xf32> to vector<8x32xf32>
    %15 = tpu.concatenate %13, %13, %13, %13 in 0 : vector<8x32xf32>, vector<8x32xf32>, vector<8x32xf32>, vector<8x32xf32> -> vector<32x32xf32>
    %16 = arith.mulf %15, %6 : vector<32x32xf32>
    %17 = tpu.concatenate %14, %14, %14, %14 in 0 : vector<8x32xf32>, vector<8x32xf32>, vector<8x32xf32>, vector<8x32xf32> -> vector<32x32xf32>
    %18 = arith.mulf %17, %6 : vector<32x32xf32>
    %cst_9 = arith.constant dense<0.000000e+00> : vector<8x32xf32>
    %19 = tpu.matmul %12, %16, %cst_9 {dimension_numbers = #tpu.dot_dimension_numbers<[1], [1], [0], [0], [0, 0, 1, 0], [], []>} : vector<8x32xf32>, vector<32x32xf32>, vector<8x32xf32> -> vector<8x32xf32>
    %cst_10 = arith.constant dense<0xFF800000> : vector<8xf32>
    %20 = vector.multi_reduction <maximumf>, %19, %cst_10 [1] : vector<8x32xf32> to vector<8xf32>
    %21 = vector.shape_cast %20 : vector<8xf32> to vector<8x1xf32>
    %22 = vector.broadcast %21 : vector<8x1xf32> to vector<8x32xf32>
    %23 = arith.subf %19, %22 : vector<8x32xf32>
    %24 = math.exp %23 : vector<8x32xf32>
    %cst_11 = arith.constant dense<0.000000e+00> : vector<8x32xf32>
    %25 = tpu.matmul %24, %6, %cst_11 {dimension_numbers = #tpu.dot_dimension_numbers<[1], [0], [0], [1], [0, 0, 1, 1], [], []>} : vector<8x32xf32>, vector<32x32xf32>, vector<8x32xf32> -> vector<8x32xf32>
    %26 = tpu.reciprocal %25 {approx = true} : vector<8x32xf32> -> vector<8x32xf32>
    %27 = arith.mulf %24, %26 : vector<8x32xf32>
    %cst_12 = arith.constant dense<0.000000e+00> : vector<8x32xf32>
    %28 = tpu.matmul %27, %18, %cst_12 {dimension_numbers = #tpu.dot_dimension_numbers<[1], [0], [0], [1], [0, 0, 1, 1], [], []>} : vector<8x32xf32>, vector<32x32xf32>, vector<8x32xf32> -> vector<8x32xf32>
    %c96 = arith.constant 96 : index
    %c0_13 = arith.constant 0 : index
    %29 = vector.load %arg2[%c96, %c0_13] : memref<504x128xf32, #tpu.memory_space<vmem>>, vector<32x32xf32>
    %cst_14 = arith.constant dense<0.000000e+00> : vector<8x32xf32>
    %30 = tpu.matmul %28, %29, %cst_14 {dimension_numbers = #tpu.dot_dimension_numbers<[1], [0], [0], [1], [0, 0, 1, 1], [], []>} : vector<8x32xf32>, vector<32x32xf32>, vector<8x32xf32> -> vector<8x32xf32>
    %c128 = arith.constant 128 : index
    %c0_15 = arith.constant 0 : index
    %31 = vector.load %arg2[%c128, %c0_15] : memref<504x128xf32, #tpu.memory_space<vmem>>, vector<1x32xf32>
    %32 = vector.broadcast %31 : vector<1x32xf32> to vector<8x32xf32>
    %33 = arith.addf %30, %32 : vector<8x32xf32>
    %34 = arith.addf %5, %33 : vector<8x32xf32>
    %c136 = arith.constant 136 : index
    %c0_16 = arith.constant 0 : index
    %35 = vector.load %arg2[%c136, %c0_16] : memref<504x128xf32, #tpu.memory_space<vmem>>, vector<1x32xf32>
    %c144 = arith.constant 144 : index
    %c0_17 = arith.constant 0 : index
    %36 = vector.load %arg2[%c144, %c0_17] : memref<504x128xf32, #tpu.memory_space<vmem>>, vector<1x32xf32>
    %cst_18 = arith.constant dense<0.000000e+00> : vector<8xf32>
    %37 = vector.multi_reduction <add>, %34, %cst_18 [1] : vector<8x32xf32> to vector<8xf32>
    %38 = vector.shape_cast %37 : vector<8xf32> to vector<8x1xf32>
    %cst_19 = arith.constant 3.200000e+01 : f32
    %39 = vector.broadcast %cst_19 : f32 to vector<8x1xf32>
    %40 = arith.divf %38, %39 : vector<8x1xf32>
    %41 = vector.broadcast %40 : vector<8x1xf32> to vector<8x32xf32>
    %42 = arith.subf %34, %41 : vector<8x32xf32>
    %43 = arith.mulf %42, %42 : vector<8x32xf32>
    %cst_20 = arith.constant dense<0.000000e+00> : vector<8xf32>
    %44 = vector.multi_reduction <add>, %43, %cst_20 [1] : vector<8x32xf32> to vector<8xf32>
    %45 = vector.shape_cast %44 : vector<8xf32> to vector<8x1xf32>
    %cst_21 = arith.constant 3.200000e+01 : f32
    %46 = vector.broadcast %cst_21 : f32 to vector<8x1xf32>
    %47 = arith.divf %45, %46 : vector<8x1xf32>
    %48 = vector.broadcast %40 : vector<8x1xf32> to vector<8x32xf32>
    %49 = arith.subf %34, %48 : vector<8x32xf32>
    %cst_22 = arith.constant 9.99999974E-6 : f32
    %50 = vector.broadcast %cst_22 : f32 to vector<8x1xf32>
    %51 = arith.addf %47, %50 : vector<8x1xf32>
    %52 = math.rsqrt %51 : vector<8x1xf32>
    %53 = vector.broadcast %52 : vector<8x1xf32> to vector<8x32xf32>
    %54 = arith.mulf %49, %53 : vector<8x32xf32>
    %55 = vector.broadcast %35 : vector<1x32xf32> to vector<8x32xf32>
    %56 = arith.mulf %54, %55 : vector<8x32xf32>
    %57 = vector.broadcast %36 : vector<1x32xf32> to vector<8x32xf32>
    %58 = arith.addf %56, %57 : vector<8x32xf32>
    %c152 = arith.constant 152 : index
    %c0_23 = arith.constant 0 : index
    %59 = vector.load %arg2[%c152, %c0_23] : memref<504x128xf32, #tpu.memory_space<vmem>>, vector<32x64xf32>
    %cst_24 = arith.constant dense<0.000000e+00> : vector<8x64xf32>
    %60 = tpu.matmul %58, %59, %cst_24 {dimension_numbers = #tpu.dot_dimension_numbers<[1], [0], [0], [1], [0, 0, 1, 1], [], []>} : vector<8x32xf32>, vector<32x64xf32>, vector<8x64xf32> -> vector<8x64xf32>
    %c184 = arith.constant 184 : index
    %c0_25 = arith.constant 0 : index
    %61 = vector.load %arg2[%c184, %c0_25] : memref<504x128xf32, #tpu.memory_space<vmem>>, vector<1x64xf32>
    %62 = vector.broadcast %61 : vector<1x64xf32> to vector<8x64xf32>
    %63 = arith.addf %60, %62 : vector<8x64xf32>
    %cst_26 = arith.constant 0.000000e+00 : f32
    %64 = vector.broadcast %cst_26 : f32 to vector<8x64xf32>
    %65 = arith.maximumf %63, %64 : vector<8x64xf32>
    %c192 = arith.constant 192 : index
    %c0_27 = arith.constant 0 : index
    %66 = vector.load %arg2[%c192, %c0_27] : memref<504x128xf32, #tpu.memory_space<vmem>>, vector<64x32xf32>
    %cst_28 = arith.constant dense<0.000000e+00> : vector<8x32xf32>
    %67 = tpu.matmul %65, %66, %cst_28 {dimension_numbers = #tpu.dot_dimension_numbers<[1], [0], [0], [1], [0, 0, 1, 1], [], []>} : vector<8x64xf32>, vector<64x32xf32>, vector<8x32xf32> -> vector<8x32xf32>
    %c256 = arith.constant 256 : index
    %c0_29 = arith.constant 0 : index
    %68 = vector.load %arg2[%c256, %c0_29] : memref<504x128xf32, #tpu.memory_space<vmem>>, vector<1x32xf32>
    %69 = vector.broadcast %68 : vector<1x32xf32> to vector<8x32xf32>
    %70 = arith.addf %67, %69 : vector<8x32xf32>
    %71 = arith.addf %58, %70 : vector<8x32xf32>
    %c264 = arith.constant 264 : index
    %c0_30 = arith.constant 0 : index
    %72 = vector.load %arg2[%c264, %c0_30] : memref<504x128xf32, #tpu.memory_space<vmem>>, vector<1x32xf32>
    %c272 = arith.constant 272 : index
    %c0_31 = arith.constant 0 : index
    %73 = vector.load %arg2[%c272, %c0_31] : memref<504x128xf32, #tpu.memory_space<vmem>>, vector<1x32xf32>
    %cst_32 = arith.constant dense<0.000000e+00> : vector<8xf32>
    %74 = vector.multi_reduction <add>, %71, %cst_32 [1] : vector<8x32xf32> to vector<8xf32>
    %75 = vector.shape_cast %74 : vector<8xf32> to vector<8x1xf32>
    %cst_33 = arith.constant 3.200000e+01 : f32
    %76 = vector.broadcast %cst_33 : f32 to vector<8x1xf32>
    %77 = arith.divf %75, %76 : vector<8x1xf32>
    %78 = vector.broadcast %77 : vector<8x1xf32> to vector<8x32xf32>
    %79 = arith.subf %71, %78 : vector<8x32xf32>
    %80 = arith.mulf %79, %79 : vector<8x32xf32>
    %cst_34 = arith.constant dense<0.000000e+00> : vector<8xf32>
    %81 = vector.multi_reduction <add>, %80, %cst_34 [1] : vector<8x32xf32> to vector<8xf32>
    %82 = vector.shape_cast %81 : vector<8xf32> to vector<8x1xf32>
    %cst_35 = arith.constant 3.200000e+01 : f32
    %83 = vector.broadcast %cst_35 : f32 to vector<8x1xf32>
    %84 = arith.divf %82, %83 : vector<8x1xf32>
    %85 = vector.broadcast %77 : vector<8x1xf32> to vector<8x32xf32>
    %86 = arith.subf %71, %85 : vector<8x32xf32>
    %cst_36 = arith.constant 9.99999974E-6 : f32
    %87 = vector.broadcast %cst_36 : f32 to vector<8x1xf32>
    %88 = arith.addf %84, %87 : vector<8x1xf32>
    %89 = math.rsqrt %88 : vector<8x1xf32>
    %90 = vector.broadcast %89 : vector<8x1xf32> to vector<8x32xf32>
    %91 = arith.mulf %86, %90 : vector<8x32xf32>
    %92 = vector.broadcast %72 : vector<1x32xf32> to vector<8x32xf32>
    %93 = arith.mulf %91, %92 : vector<8x32xf32>
    %94 = vector.broadcast %73 : vector<1x32xf32> to vector<8x32xf32>
    %95 = arith.addf %93, %94 : vector<8x32xf32>
    %c280 = arith.constant 280 : index
    %c0_37 = arith.constant 0 : index
    %96 = vector.load %arg2[%c280, %c0_37] : memref<504x128xf32, #tpu.memory_space<vmem>>, vector<32x96xf32>
    %cst_38 = arith.constant dense<0.000000e+00> : vector<8x96xf32>
    %97 = tpu.matmul %95, %96, %cst_38 {dimension_numbers = #tpu.dot_dimension_numbers<[1], [0], [0], [1], [0, 0, 1, 1], [], []>} : vector<8x32xf32>, vector<32x96xf32>, vector<8x96xf32> -> vector<8x96xf32>
    %c312 = arith.constant 312 : index
    %c0_39 = arith.constant 0 : index
    %98 = vector.load %arg2[%c312, %c0_39] : memref<504x128xf32, #tpu.memory_space<vmem>>, vector<1x96xf32>
    %99 = vector.broadcast %98 : vector<1x96xf32> to vector<8x96xf32>
    %100 = arith.addf %97, %99 : vector<8x96xf32>
    %101 = vector.extract_strided_slice %100 {offsets = [0, 0], sizes = [8, 32], strides = [1, 1]} : vector<8x96xf32> to vector<8x32xf32>
    %102 = vector.extract_strided_slice %100 {offsets = [0, 32], sizes = [8, 32], strides = [1, 1]} : vector<8x96xf32> to vector<8x32xf32>
    %103 = vector.extract_strided_slice %100 {offsets = [0, 64], sizes = [8, 32], strides = [1, 1]} : vector<8x96xf32> to vector<8x32xf32>
    %104 = tpu.concatenate %102, %102, %102, %102 in 0 : vector<8x32xf32>, vector<8x32xf32>, vector<8x32xf32>, vector<8x32xf32> -> vector<32x32xf32>
    %105 = arith.mulf %104, %6 : vector<32x32xf32>
    %106 = tpu.concatenate %103, %103, %103, %103 in 0 : vector<8x32xf32>, vector<8x32xf32>, vector<8x32xf32>, vector<8x32xf32> -> vector<32x32xf32>
    %107 = arith.mulf %106, %6 : vector<32x32xf32>
    %cst_40 = arith.constant dense<0.000000e+00> : vector<8x32xf32>
    %108 = tpu.matmul %101, %105, %cst_40 {dimension_numbers = #tpu.dot_dimension_numbers<[1], [1], [0], [0], [0, 0, 1, 0], [], []>} : vector<8x32xf32>, vector<32x32xf32>, vector<8x32xf32> -> vector<8x32xf32>
    %cst_41 = arith.constant dense<0xFF800000> : vector<8xf32>
    %109 = vector.multi_reduction <maximumf>, %108, %cst_41 [1] : vector<8x32xf32> to vector<8xf32>
    %110 = vector.shape_cast %109 : vector<8xf32> to vector<8x1xf32>
    %111 = vector.broadcast %110 : vector<8x1xf32> to vector<8x32xf32>
    %112 = arith.subf %108, %111 : vector<8x32xf32>
    %113 = math.exp %112 : vector<8x32xf32>
    %cst_42 = arith.constant dense<0.000000e+00> : vector<8x32xf32>
    %114 = tpu.matmul %113, %6, %cst_42 {dimension_numbers = #tpu.dot_dimension_numbers<[1], [0], [0], [1], [0, 0, 1, 1], [], []>} : vector<8x32xf32>, vector<32x32xf32>, vector<8x32xf32> -> vector<8x32xf32>
    %115 = tpu.reciprocal %114 {approx = true} : vector<8x32xf32> -> vector<8x32xf32>
    %116 = arith.mulf %113, %115 : vector<8x32xf32>
    %cst_43 = arith.constant dense<0.000000e+00> : vector<8x32xf32>
    %117 = tpu.matmul %116, %107, %cst_43 {dimension_numbers = #tpu.dot_dimension_numbers<[1], [0], [0], [1], [0, 0, 1, 1], [], []>} : vector<8x32xf32>, vector<32x32xf32>, vector<8x32xf32> -> vector<8x32xf32>
    %c320 = arith.constant 320 : index
    %c0_44 = arith.constant 0 : index
    %118 = vector.load %arg2[%c320, %c0_44] : memref<504x128xf32, #tpu.memory_space<vmem>>, vector<32x32xf32>
    %cst_45 = arith.constant dense<0.000000e+00> : vector<8x32xf32>
    %119 = tpu.matmul %117, %118, %cst_45 {dimension_numbers = #tpu.dot_dimension_numbers<[1], [0], [0], [1], [0, 0, 1, 1], [], []>} : vector<8x32xf32>, vector<32x32xf32>, vector<8x32xf32> -> vector<8x32xf32>
    %c352 = arith.constant 352 : index
    %c0_46 = arith.constant 0 : index
    %120 = vector.load %arg2[%c352, %c0_46] : memref<504x128xf32, #tpu.memory_space<vmem>>, vector<1x32xf32>
    %121 = vector.broadcast %120 : vector<1x32xf32> to vector<8x32xf32>
    %122 = arith.addf %119, %121 : vector<8x32xf32>
    %123 = arith.addf %95, %122 : vector<8x32xf32>
    %c360 = arith.constant 360 : index
    %c0_47 = arith.constant 0 : index
    %124 = vector.load %arg2[%c360, %c0_47] : memref<504x128xf32, #tpu.memory_space<vmem>>, vector<1x32xf32>
    %c368 = arith.constant 368 : index
    %c0_48 = arith.constant 0 : index
    %125 = vector.load %arg2[%c368, %c0_48] : memref<504x128xf32, #tpu.memory_space<vmem>>, vector<1x32xf32>
    %cst_49 = arith.constant dense<0.000000e+00> : vector<8xf32>
    %126 = vector.multi_reduction <add>, %123, %cst_49 [1] : vector<8x32xf32> to vector<8xf32>
    %127 = vector.shape_cast %126 : vector<8xf32> to vector<8x1xf32>
    %cst_50 = arith.constant 3.200000e+01 : f32
    %128 = vector.broadcast %cst_50 : f32 to vector<8x1xf32>
    %129 = arith.divf %127, %128 : vector<8x1xf32>
    %130 = vector.broadcast %129 : vector<8x1xf32> to vector<8x32xf32>
    %131 = arith.subf %123, %130 : vector<8x32xf32>
    %132 = arith.mulf %131, %131 : vector<8x32xf32>
    %cst_51 = arith.constant dense<0.000000e+00> : vector<8xf32>
    %133 = vector.multi_reduction <add>, %132, %cst_51 [1] : vector<8x32xf32> to vector<8xf32>
    %134 = vector.shape_cast %133 : vector<8xf32> to vector<8x1xf32>
    %cst_52 = arith.constant 3.200000e+01 : f32
    %135 = vector.broadcast %cst_52 : f32 to vector<8x1xf32>
    %136 = arith.divf %134, %135 : vector<8x1xf32>
    %137 = vector.broadcast %129 : vector<8x1xf32> to vector<8x32xf32>
    %138 = arith.subf %123, %137 : vector<8x32xf32>
    %cst_53 = arith.constant 9.99999974E-6 : f32
    %139 = vector.broadcast %cst_53 : f32 to vector<8x1xf32>
    %140 = arith.addf %136, %139 : vector<8x1xf32>
    %141 = math.rsqrt %140 : vector<8x1xf32>
    %142 = vector.broadcast %141 : vector<8x1xf32> to vector<8x32xf32>
    %143 = arith.mulf %138, %142 : vector<8x32xf32>
    %144 = vector.broadcast %124 : vector<1x32xf32> to vector<8x32xf32>
    %145 = arith.mulf %143, %144 : vector<8x32xf32>
    %146 = vector.broadcast %125 : vector<1x32xf32> to vector<8x32xf32>
    %147 = arith.addf %145, %146 : vector<8x32xf32>
    %c376 = arith.constant 376 : index
    %c0_54 = arith.constant 0 : index
    %148 = vector.load %arg2[%c376, %c0_54] : memref<504x128xf32, #tpu.memory_space<vmem>>, vector<32x64xf32>
    %cst_55 = arith.constant dense<0.000000e+00> : vector<8x64xf32>
    %149 = tpu.matmul %147, %148, %cst_55 {dimension_numbers = #tpu.dot_dimension_numbers<[1], [0], [0], [1], [0, 0, 1, 1], [], []>} : vector<8x32xf32>, vector<32x64xf32>, vector<8x64xf32> -> vector<8x64xf32>
    %c408 = arith.constant 408 : index
    %c0_56 = arith.constant 0 : index
    %150 = vector.load %arg2[%c408, %c0_56] : memref<504x128xf32, #tpu.memory_space<vmem>>, vector<1x64xf32>
    %151 = vector.broadcast %150 : vector<1x64xf32> to vector<8x64xf32>
    %152 = arith.addf %149, %151 : vector<8x64xf32>
    %cst_57 = arith.constant 0.000000e+00 : f32
    %153 = vector.broadcast %cst_57 : f32 to vector<8x64xf32>
    %154 = arith.maximumf %152, %153 : vector<8x64xf32>
    %c416 = arith.constant 416 : index
    %c0_58 = arith.constant 0 : index
    %155 = vector.load %arg2[%c416, %c0_58] : memref<504x128xf32, #tpu.memory_space<vmem>>, vector<64x32xf32>
    %cst_59 = arith.constant dense<0.000000e+00> : vector<8x32xf32>
    %156 = tpu.matmul %154, %155, %cst_59 {dimension_numbers = #tpu.dot_dimension_numbers<[1], [0], [0], [1], [0, 0, 1, 1], [], []>} : vector<8x64xf32>, vector<64x32xf32>, vector<8x32xf32> -> vector<8x32xf32>
    %c480 = arith.constant 480 : index
    %c0_60 = arith.constant 0 : index
    %157 = vector.load %arg2[%c480, %c0_60] : memref<504x128xf32, #tpu.memory_space<vmem>>, vector<1x32xf32>
    %158 = vector.broadcast %157 : vector<1x32xf32> to vector<8x32xf32>
    %159 = arith.addf %156, %158 : vector<8x32xf32>
    %160 = arith.addf %147, %159 : vector<8x32xf32>
    %c488 = arith.constant 488 : index
    %c0_61 = arith.constant 0 : index
    %161 = vector.load %arg2[%c488, %c0_61] : memref<504x128xf32, #tpu.memory_space<vmem>>, vector<1x32xf32>
    %c496 = arith.constant 496 : index
    %c0_62 = arith.constant 0 : index
    %162 = vector.load %arg2[%c496, %c0_62] : memref<504x128xf32, #tpu.memory_space<vmem>>, vector<1x32xf32>
    %cst_63 = arith.constant dense<0.000000e+00> : vector<8xf32>
    %163 = vector.multi_reduction <add>, %160, %cst_63 [1] : vector<8x32xf32> to vector<8xf32>
    %164 = vector.shape_cast %163 : vector<8xf32> to vector<8x1xf32>
    %cst_64 = arith.constant 3.200000e+01 : f32
    %165 = vector.broadcast %cst_64 : f32 to vector<8x1xf32>
    %166 = arith.divf %164, %165 : vector<8x1xf32>
    %167 = vector.broadcast %166 : vector<8x1xf32> to vector<8x32xf32>
    %168 = arith.subf %160, %167 : vector<8x32xf32>
    %169 = arith.mulf %168, %168 : vector<8x32xf32>
    %cst_65 = arith.constant dense<0.000000e+00> : vector<8xf32>
    %170 = vector.multi_reduction <add>, %169, %cst_65 [1] : vector<8x32xf32> to vector<8xf32>
    %171 = vector.shape_cast %170 : vector<8xf32> to vector<8x1xf32>
    %cst_66 = arith.constant 3.200000e+01 : f32
    %172 = vector.broadcast %cst_66 : f32 to vector<8x1xf32>
    %173 = arith.divf %171, %172 : vector<8x1xf32>
    %174 = vector.broadcast %166 : vector<8x1xf32> to vector<8x32xf32>
    %175 = arith.subf %160, %174 : vector<8x32xf32>
    %cst_67 = arith.constant 9.99999974E-6 : f32
    %176 = vector.broadcast %cst_67 : f32 to vector<8x1xf32>
    %177 = arith.addf %173, %176 : vector<8x1xf32>
    %178 = math.rsqrt %177 : vector<8x1xf32>
    %179 = vector.broadcast %178 : vector<8x1xf32> to vector<8x32xf32>
    %180 = arith.mulf %175, %179 : vector<8x32xf32>
    %181 = vector.broadcast %161 : vector<1x32xf32> to vector<8x32xf32>
    %182 = arith.mulf %180, %181 : vector<8x32xf32>
    %183 = vector.broadcast %162 : vector<1x32xf32> to vector<8x32xf32>
    %184 = arith.addf %182, %183 : vector<8x32xf32>
    %cst_68 = arith.constant dense<0.000000e+00> : vector<32xf32>
    %185 = vector.multi_reduction <add>, %184, %cst_68 [0] : vector<8x32xf32> to vector<32xf32>
    %186 = vector.shape_cast %185 : vector<32xf32> to vector<1x32xf32>
    %cst_69 = arith.constant 8.000000e+00 : f32
    %187 = vector.broadcast %cst_69 : f32 to vector<1x32xf32>
    %188 = arith.divf %186, %187 : vector<1x32xf32>
    %c8 = arith.constant 8 : index
    %c0_70 = arith.constant 0 : index
    %189 = vector.load %arg2[%c8, %c0_70] : memref<504x128xf32, #tpu.memory_space<vmem>>, vector<1x32xf32>
    %190 = arith.mulf %188, %189 : vector<1x32xf32>
    %cst_71 = arith.constant dense<0.000000e+00> : vector<1xf32>
    %191 = vector.multi_reduction <add>, %190, %cst_71 [1] : vector<1x32xf32> to vector<1xf32>
    %192 = vector.shape_cast %191 : vector<1xf32> to vector<1x1xf32>
    %c16 = arith.constant 16 : index
    %c0_72 = arith.constant 0 : index
    %193 = vector.load %arg2[%c16, %c0_72] : memref<504x128xf32, #tpu.memory_space<vmem>>, vector<1x1xf32>
    %194 = arith.addf %192, %193 : vector<1x1xf32>
    %195 = vector.shape_cast %194 : vector<1x1xf32> to vector<1x1xf32>
    %196 = vector.broadcast %195 : vector<1x1xf32> to vector<8x128xf32>
    %c0_73 = arith.constant 0 : index
    %c0_74 = arith.constant 0 : index
    %197 = vector.load %arg3[%c0_73, %c0_74] : memref<8x128xf32, #tpu.memory_space<vmem>>, vector<8x128xf32>
    tpu.vector_store %arg3[%c0_73, %c0_74], %196 {strides = array<i32>} : memref<8x128xf32, #tpu.memory_space<vmem>>, vector<8x128xf32>,
    return
  }
}

</mosaic_0001>

<llo_original>
// kernel: combined_model_forward.1
$region0: #{combined_model_forward.1}
  #allocation0 [shape = 'u32[]', space=smem, size = 0x4, offset = 0x4, fixed_abs, tag = 'smem constant byte address 0x4 - core index']
  #allocation1 [shape = 'u32[144,128]{1,0:T(1,128)}', space=vmem, size = 0x12000, scoped, tag = 'internal scratch']
  %s0 = inlined_call_operand.vmem [shape: bf16[8,1024], index: 0, kind: input, shape index: {}]
  %s1 = inlined_call_operand.vmem [shape: bf16[1024,32], index: 1, kind: input, shape index: {}]
  %s2 = inlined_call_operand.vmem [shape: f32[504,128], index: 2, kind: input, shape index: {}]
  %s3 = inlined_call_operand.vmem [shape: f32[8,128], index: 3, kind: output, shape index: {}]
  %s4 = sld [smem:[#allocation0]]
  $region22: #{combined_model_forward.1} parent=0
    _
  %s6 = ssub.s32 1, %s4
  %s7 = scalar_select 0, %s6, %s4
  // Predicated region
  $region2: #{combined_model_forward.1} parent=0 // pred_check
    _
  $region3: #{combined_model_forward.1} parent=0 // pred_check_branch
    %9 = sbr.rel (0) target = $region5
  $region4: #{combined_model_forward.1} parent=0 // pred_region
    _
  $region5: #{combined_model_forward.1} parent=0 // pred_fallthru
    _
  // Predicated region
  $region6: #{combined_model_forward.1} parent=0 // pred_check
    _
  $region7: #{combined_model_forward.1} parent=0 // pred_check_branch
    %11 = sbr.rel (0) target = $region9
  $region8: #{combined_model_forward.1} parent=0 // pred_region
    _
  $region9: #{combined_model_forward.1} parent=0 // pred_fallthru
    _
  // Predicated region
  $region10: #{combined_model_forward.1} parent=0 // pred_check
    _
  $region11: #{combined_model_forward.1} parent=0 // pred_check_branch
    %13 = sbr.rel (0) target = $region13
  $region12: #{combined_model_forward.1} parent=0 // pred_region
    _
  $region13: #{combined_model_forward.1} parent=0 // pred_fallthru
    _
  %v15 = vld [vmem:[%s0] sm:$0xff]
  %v16 = vld [vmem:[%s0 + $0x8] sm:$0xff]
  %v17 = vld [vmem:[%s0 + $0x10] sm:$0xff]
  %v18 = vld [vmem:[%s0 + $0x18] sm:$0xff]
  %v19 = vld [vmem:[%s1] sm:$0xf]
  %v20 = vld [vmem:[%s1 + $0x4] sm:$0xf]
  %v21 = vld [vmem:[%s1 + $0x8] sm:$0xf]
  %v22 = vld [vmem:[%s1 + $0xc] sm:$0xf]
  %v23 = vld [vmem:[%s1 + $0x10] sm:$0xf]
  %v24 = vld [vmem:[%s1 + $0x14] sm:$0xf]
  %v25 = vld [vmem:[%s1 + $0x18] sm:$0xf]
  %v26 = vld [vmem:[%s1 + $0x1c] sm:$0xf]
  %v27 = vld [vmem:[%s1 + $0x20] sm:$0xf]
  %v28 = vld [vmem:[%s1 + $0x24] sm:$0xf]
  %v29 = vld [vmem:[%s1 + $0x28] sm:$0xf]
  %v30 = vld [vmem:[%s1 + $0x2c] sm:$0xf]
  %v31 = vld [vmem:[%s1 + $0x30] sm:$0xf]
  %v32 = vld [vmem:[%s1 + $0x34] sm:$0xf]
  %v33 = vld [vmem:[%s1 + $0x38] sm:$0xf]
  %v34 = vld [vmem:[%s1 + $0x3c] sm:$0xf]
  %v35 = vld [vmem:[%s1 + $0x40] sm:$0xf]
  %v36 = vld [vmem:[%s1 + $0x44] sm:$0xf]
  %v37 = vld [vmem:[%s1 + $0x48] sm:$0xf]
  %v38 = vld [vmem:[%s1 + $0x4c] sm:$0xf]
  %v39 = vld [vmem:[%s1 + $0x50] sm:$0xf]
  %v40 = vld [vmem:[%s1 + $0x54] sm:$0xf]
  %v41 = vld [vmem:[%s1 + $0x58] sm:$0xf]
  %v42 = vld [vmem:[%s1 + $0x5c] sm:$0xf]
  %v43 = vld [vmem:[%s1 + $0x60] sm:$0xf]
  %v44 = vld [vmem:[%s1 + $0x64] sm:$0xf]
  %v45 = vld [vmem:[%s1 + $0x68] sm:$0xf]
  %v46 = vld [vmem:[%s1 + $0x6c] sm:$0xf]
  %v47 = vld [vmem:[%s1 + $0x70] sm:$0xf]
  %v48 = vld [vmem:[%s1 + $0x74] sm:$0xf]
  %v49 = vld [vmem:[%s1 + $0x78] sm:$0xf]
  %v50 = vld [vmem:[%s1 + $0x7c] sm:$0xf]
  %v51 = vld [vmem:[%s1 + $0x80] sm:$0xf]
  %v52 = vld [vmem:[%s1 + $0x84] sm:$0xf]
  %v53 = vld [vmem:[%s1 + $0x88] sm:$0xf]
  %v54 = vld [vmem:[%s1 + $0x8c] sm:$0xf]
  %v55 = vld [vmem:[%s1 + $0x90] sm:$0xf]
  %v56 = vld [vmem:[%s1 + $0x94] sm:$0xf]
  %v57 = vld [vmem:[%s1 + $0x98] sm:$0xf]
  %v58 = vld [vmem:[%s1 + $0x9c] sm:$0xf]
  %v59 = vld [vmem:[%s1 + $0xa0] sm:$0xf]
  %v60 = vld [vmem:[%s1 + $0xa4] sm:$0xf]
  %v61 = vld [vmem:[%s1 + $0xa8] sm:$0xf]
  %v62 = vld [vmem:[%s1 + $0xac] sm:$0xf]
  %v63 = vld [vmem:[%s1 + $0xb0] sm:$0xf]
  %v64 = vld [vmem:[%s1 + $0xb4] sm:$0xf]
  %v65 = vld [vmem:[%s1 + $0xb8] sm:$0xf]
  %v66 = vld [vmem:[%s1 + $0xbc] sm:$0xf]
  %v67 = vld [vmem:[%s1 + $0xc0] sm:$0xf]
  %v68 = vld [vmem:[%s1 + $0xc4] sm:$0xf]
  %v69 = vld [vmem:[%s1 + $0xc8] sm:$0xf]
  %v70 = vld [vmem:[%s1 + $0xcc] sm:$0xf]
  %v71 = vld [vmem:[%s1 + $0xd0] sm:$0xf]
  %v72 = vld [vmem:[%s1 + $0xd4] sm:$0xf]
  %v73 = vld [vmem:[%s1 + $0xd8] sm:$0xf]
  %v74 = vld [vmem:[%s1 + $0xdc] sm:$0xf]
  %v75 = vld [vmem:[%s1 + $0xe0] sm:$0xf]
  %v76 = vld [vmem:[%s1 + $0xe4] sm:$0xf]
  %v77 = vld [vmem:[%s1 + $0xe8] sm:$0xf]
  %v78 = vld [vmem:[%s1 + $0xec] sm:$0xf]
  %v79 = vld [vmem:[%s1 + $0xf0] sm:$0xf]
  %v80 = vld [vmem:[%s1 + $0xf4] sm:$0xf]
  %v81 = vld [vmem:[%s1 + $0xf8] sm:$0xf]
  %v82 = vld [vmem:[%s1 + $0xfc] sm:$0xf]
  %v83 = vld [vmem:[%s1 + $0x100] sm:$0xf]
  %v84 = vld [vmem:[%s1 + $0x104] sm:$0xf]
  %v85 = vld [vmem:[%s1 + $0x108] sm:$0xf]
  %v86 = vld [vmem:[%s1 + $0x10c] sm:$0xf]
  %v87 = vld [vmem:[%s1 + $0x110] sm:$0xf]
  %v88 = vld [vmem:[%s1 + $0x114] sm:$0xf]
  %v89 = vld [vmem:[%s1 + $0x118] sm:$0xf]
  %v90 = vld [vmem:[%s1 + $0x11c] sm:$0xf]
  %v91 = vld [vmem:[%s1 + $0x120] sm:$0xf]
  %v92 = vld [vmem:[%s1 + $0x124] sm:$0xf]
  %v93 = vld [vmem:[%s1 + $0x128] sm:$0xf]
  %v94 = vld [vmem:[%s1 + $0x12c] sm:$0xf]
  %v95 = vld [vmem:[%s1 + $0x130] sm:$0xf]
  %v96 = vld [vmem:[%s1 + $0x134] sm:$0xf]
  %v97 = vld [vmem:[%s1 + $0x138] sm:$0xf]
  %v98 = vld [vmem:[%s1 + $0x13c] sm:$0xf]
  %v99 = vld [vmem:[%s1 + $0x140] sm:$0xf]
  %v100 = vld [vmem:[%s1 + $0x144] sm:$0xf]
  %v101 = vld [vmem:[%s1 + $0x148] sm:$0xf]
  %v102 = vld [vmem:[%s1 + $0x14c] sm:$0xf]
  %v103 = vld [vmem:[%s1 + $0x150] sm:$0xf]
  %v104 = vld [vmem:[%s1 + $0x154] sm:$0xf]
  %v105 = vld [vmem:[%s1 + $0x158] sm:$0xf]
  %v106 = vld [vmem:[%s1 + $0x15c] sm:$0xf]
  %v107 = vld [vmem:[%s1 + $0x160] sm:$0xf]
  %v108 = vld [vmem:[%s1 + $0x164] sm:$0xf]
  %v109 = vld [vmem:[%s1 + $0x168] sm:$0xf]
  %v110 = vld [vmem:[%s1 + $0x16c] sm:$0xf]
  %v111 = vld [vmem:[%s1 + $0x170] sm:$0xf]
  %v112 = vld [vmem:[%s1 + $0x174] sm:$0xf]
  %v113 = vld [vmem:[%s1 + $0x178] sm:$0xf]
  %v114 = vld [vmem:[%s1 + $0x17c] sm:$0xf]
  %v115 = vld [vmem:[%s1 + $0x180] sm:$0xf]
  %v116 = vld [vmem:[%s1 + $0x184] sm:$0xf]
  %v117 = vld [vmem:[%s1 + $0x188] sm:$0xf]
  %v118 = vld [vmem:[%s1 + $0x18c] sm:$0xf]
  %v119 = vld [vmem:[%s1 + $0x190] sm:$0xf]
  %v120 = vld [vmem:[%s1 + $0x194] sm:$0xf]
  %v121 = vld [vmem:[%s1 + $0x198] sm:$0xf]
  %v122 = vld [vmem:[%s1 + $0x19c] sm:$0xf]
  %v123 = vld [vmem:[%s1 + $0x1a0] sm:$0xf]
  %v124 = vld [vmem:[%s1 + $0x1a4] sm:$0xf]
  %v125 = vld [vmem:[%s1 + $0x1a8] sm:$0xf]
  %v126 = vld [vmem:[%s1 + $0x1ac] sm:$0xf]
  %v127 = vld [vmem:[%s1 + $0x1b0] sm:$0xf]
  %v128 = vld [vmem:[%s1 + $0x1b4] sm:$0xf]
  %v129 = vld [vmem:[%s1 + $0x1b8] sm:$0xf]
  %v130 = vld [vmem:[%s1 + $0x1bc] sm:$0xf]
  %v131 = vld [vmem:[%s1 + $0x1c0] sm:$0xf]
  %v132 = vld [vmem:[%s1 + $0x1c4] sm:$0xf]
  %v133 = vld [vmem:[%s1 + $0x1c8] sm:$0xf]
  %v134 = vld [vmem:[%s1 + $0x1cc] sm:$0xf]
  %v135 = vld [vmem:[%s1 + $0x1d0] sm:$0xf]
  %v136 = vld [vmem:[%s1 + $0x1d4] sm:$0xf]
  %v137 = vld [vmem:[%s1 + $0x1d8] sm:$0xf]
  %v138 = vld [vmem:[%s1 + $0x1dc] sm:$0xf]
  %v139 = vld [vmem:[%s1 + $0x1e0] sm:$0xf]
  %v140 = vld [vmem:[%s1 + $0x1e4] sm:$0xf]
  %v141 = vld [vmem:[%s1 + $0x1e8] sm:$0xf]
  %v142 = vld [vmem:[%s1 + $0x1ec] sm:$0xf]
  %v143 = vld [vmem:[%s1 + $0x1f0] sm:$0xf]
  %v144 = vld [vmem:[%s1 + $0x1f4] sm:$0xf]
  %v145 = vld [vmem:[%s1 + $0x1f8] sm:$0xf]
  %v146 = vld [vmem:[%s1 + $0x1fc] sm:$0xf]
  %v147 = vld [vmem:[%s2] sm:$0x1]
  %v148 = vlaneseq
  %v149 = vshrl.u32 %v148, 7
  %v150 = vsub.s32 0, %v149
  %v151 = vrot.slane %v147, %v150
  %v156 = vunpack.c.l.b16 %v15
  %v157 = vunpack.c.h.b16 %v15
  %v158 = vunpack.c.l.b16 %v16
  %v159 = vunpack.c.h.b16 %v16
  %v160 = vunpack.c.l.b16 %v17
  %v161 = vunpack.c.h.b16 %v17
  %v162 = vunpack.c.l.b16 %v18
  %v163 = vunpack.c.h.b16 %v18
  %v164 = vpack.c.b16 %v156, %v156
  %v165 = vpack.c.b16 %v157, %v157
  %v166 = vpack.c.b16 %v158, %v158
  %v167 = vpack.c.b16 %v159, %v159
  %v168 = vpack.c.b16 %v160, %v160
  %v169 = vpack.c.b16 %v161, %v161
  %v170 = vpack.c.b16 %v162, %v162
  %v171 = vpack.c.b16 %v163, %v163
  %v308 = vunpack.c.l.b16 %v19
  %v309 = vunpack.c.l.b16 %v20
  %v310 = vunpack.c.l.b16 %v21
  %v311 = vunpack.c.l.b16 %v22
  %v312 = vunpack.c.l.b16 %v23
  %v313 = vunpack.c.l.b16 %v24
  %v314 = vunpack.c.l.b16 %v25
  %v315 = vunpack.c.l.b16 %v26
  %v316 = vunpack.c.l.b16 %v27
  %v317 = vunpack.c.l.b16 %v28
  %v318 = vunpack.c.l.b16 %v29
  %v319 = vunpack.c.l.b16 %v30
  %v320 = vunpack.c.l.b16 %v31
  %v321 = vunpack.c.l.b16 %v32
  %v322 = vunpack.c.l.b16 %v33
  %v323 = vunpack.c.l.b16 %v34
  %v324 = vunpack.c.l.b16 %v35
  %v325 = vunpack.c.l.b16 %v36
  %v326 = vunpack.c.l.b16 %v37
  %v327 = vunpack.c.l.b16 %v38
  %v328 = vunpack.c.l.b16 %v39
  %v329 = vunpack.c.l.b16 %v40
  %v330 = vunpack.c.l.b16 %v41
  %v331 = vunpack.c.l.b16 %v42
  %v332 = vunpack.c.l.b16 %v43
  %v333 = vunpack.c.l.b16 %v44
  %v334 = vunpack.c.l.b16 %v45
  %v335 = vunpack.c.l.b16 %v46
  %v336 = vunpack.c.l.b16 %v47
  %v337 = vunpack.c.l.b16 %v48
  %v338 = vunpack.c.l.b16 %v49
  %v339 = vunpack.c.l.b16 %v50
  %v340 = vunpack.c.l.b16 %v51
  %v341 = vunpack.c.l.b16 %v52
  %v342 = vunpack.c.l.b16 %v53
  %v343 = vunpack.c.l.b16 %v54
  %v344 = vunpack.c.l.b16 %v55
  %v345 = vunpack.c.l.b16 %v56
  %v346 = vunpack.c.l.b16 %v57
  %v347 = vunpack.c.l.b16 %v58
  %v348 = vunpack.c.l.b16 %v59
  %v349 = vunpack.c.l.b16 %v60
  %v350 = vunpack.c.l.b16 %v61
  %v351 = vunpack.c.l.b16 %v62
  %v352 = vunpack.c.l.b16 %v63
  %v353 = vunpack.c.l.b16 %v64
  %v354 = vunpack.c.l.b16 %v65
  %v355 = vunpack.c.l.b16 %v66
  %v356 = vunpack.c.l.b16 %v67
  %v357 = vunpack.c.l.b16 %v68
  %v358 = vunpack.c.l.b16 %v69
  %v359 = vunpack.c.l.b16 %v70
  %v360 = vunpack.c.l.b16 %v71
  %v361 = vunpack.c.l.b16 %v72
  %v362 = vunpack.c.l.b16 %v73
  %v363 = vunpack.c.l.b16 %v74
  %v364 = vunpack.c.l.b16 %v75
  %v365 = vunpack.c.l.b16 %v76
  %v366 = vunpack.c.l.b16 %v77
  %v367 = vunpack.c.l.b16 %v78
  %v368 = vunpack.c.l.b16 %v79
  %v369 = vunpack.c.l.b16 %v80
  %v370 = vunpack.c.l.b16 %v81
  %v371 = vunpack.c.l.b16 %v82
  %v372 = vunpack.c.l.b16 %v83
  %v373 = vunpack.c.l.b16 %v84
  %v374 = vunpack.c.l.b16 %v85
  %v375 = vunpack.c.l.b16 %v86
  %v376 = vunpack.c.l.b16 %v87
  %v377 = vunpack.c.l.b16 %v88
  %v378 = vunpack.c.l.b16 %v89
  %v379 = vunpack.c.l.b16 %v90
  %v380 = vunpack.c.l.b16 %v91
  %v381 = vunpack.c.l.b16 %v92
  %v382 = vunpack.c.l.b16 %v93
  %v383 = vunpack.c.l.b16 %v94
  %v384 = vunpack.c.l.b16 %v95
  %v385 = vunpack.c.l.b16 %v96
  %v386 = vunpack.c.l.b16 %v97
  %v387 = vunpack.c.l.b16 %v98
  %v388 = vunpack.c.l.b16 %v99
  %v389 = vunpack.c.l.b16 %v100
  %v390 = vunpack.c.l.b16 %v101
  %v391 = vunpack.c.l.b16 %v102
  %v392 = vunpack.c.l.b16 %v103
  %v393 = vunpack.c.l.b16 %v104
  %v394 = vunpack.c.l.b16 %v105
  %v395 = vunpack.c.l.b16 %v106
  %v396 = vunpack.c.l.b16 %v107
  %v397 = vunpack.c.l.b16 %v108
  %v398 = vunpack.c.l.b16 %v109
  %v399 = vunpack.c.l.b16 %v110
  %v400 = vunpack.c.l.b16 %v111
  %v401 = vunpack.c.l.b16 %v112
  %v402 = vunpack.c.l.b16 %v113
  %v403 = vunpack.c.l.b16 %v114
  %v404 = vunpack.c.l.b16 %v115
  %v405 = vunpack.c.l.b16 %v116
  %v406 = vunpack.c.l.b16 %v117
  %v407 = vunpack.c.l.b16 %v118
  %v408 = vunpack.c.l.b16 %v119
  %v409 = vunpack.c.l.b16 %v120
  %v410 = vunpack.c.l.b16 %v121
  %v411 = vunpack.c.l.b16 %v122
  %v412 = vunpack.c.l.b16 %v123
  %v413 = vunpack.c.l.b16 %v124
  %v414 = vunpack.c.l.b16 %v125
  %v415 = vunpack.c.l.b16 %v126
  %v416 = vunpack.c.l.b16 %v127
  %v417 = vunpack.c.l.b16 %v128
  %v418 = vunpack.c.l.b16 %v129
  %v419 = vunpack.c.l.b16 %v130
  %v420 = vunpack.c.l.b16 %v131
  %v421 = vunpack.c.l.b16 %v132
  %v422 = vunpack.c.l.b16 %v133
  %v423 = vunpack.c.l.b16 %v134
  %v424 = vunpack.c.l.b16 %v135
  %v425 = vunpack.c.l.b16 %v136
  %v426 = vunpack.c.l.b16 %v137
  %v427 = vunpack.c.l.b16 %v138
  %v428 = vunpack.c.l.b16 %v139
  %v429 = vunpack.c.l.b16 %v140
  %v430 = vunpack.c.l.b16 %v141
  %v431 = vunpack.c.l.b16 %v142
  %v432 = vunpack.c.l.b16 %v143
  %v433 = vunpack.c.l.b16 %v144
  %v434 = vunpack.c.l.b16 %v145
  %v435 = vunpack.c.l.b16 %v146
  %v436 = vpack.c.b16 %v309, %v308
  %v437 = vpack.c.b16 %v311, %v310
  %v438 = vpack.c.b16 %v313, %v312
  %v439 = vpack.c.b16 %v315, %v314
  %v440 = vpack.c.b16 %v317, %v316
  %v441 = vpack.c.b16 %v319, %v318
  %v442 = vpack.c.b16 %v321, %v320
  %v443 = vpack.c.b16 %v323, %v322
  %v444 = vpack.c.b16 %v325, %v324
  %v445 = vpack.c.b16 %v327, %v326
  %v446 = vpack.c.b16 %v329, %v328
  %v447 = vpack.c.b16 %v331, %v330
  %v448 = vpack.c.b16 %v333, %v332
  %v449 = vpack.c.b16 %v335, %v334
  %v450 = vpack.c.b16 %v337, %v336
  %v451 = vpack.c.b16 %v339, %v338
  %v452 = vpack.c.b16 %v341, %v340
  %v453 = vpack.c.b16 %v343, %v342
  %v454 = vpack.c.b16 %v345, %v344
  %v455 = vpack.c.b16 %v347, %v346
  %v456 = vpack.c.b16 %v349, %v348
  %v457 = vpack.c.b16 %v351, %v350
  %v458 = vpack.c.b16 %v353, %v352
  %v459 = vpack.c.b16 %v355, %v354
  %v460 = vpack.c.b16 %v357, %v356
  %v461 = vpack.c.b16 %v359, %v358
  %v462 = vpack.c.b16 %v361, %v360
  %v463 = vpack.c.b16 %v363, %v362
  %v464 = vpack.c.b16 %v365, %v364
  %v465 = vpack.c.b16 %v367, %v366
  %v466 = vpack.c.b16 %v369, %v368
  %v467 = vpack.c.b16 %v371, %v370
  %v468 = vpack.c.b16 %v373, %v372
  %v469 = vpack.c.b16 %v375, %v374
  %v470 = vpack.c.b16 %v377, %v376
  %v471 = vpack.c.b16 %v379, %v378
  %v472 = vpack.c.b16 %v381, %v380
  %v473 = vpack.c.b16 %v383, %v382
  %v474 = vpack.c.b16 %v385, %v384
  %v475 = vpack.c.b16 %v387, %v386
  %v476 = vpack.c.b16 %v389, %v388
  %v477 = vpack.c.b16 %v391, %v390
  %v478 = vpack.c.b16 %v393, %v392
  %v479 = vpack.c.b16 %v395, %v394
  %v480 = vpack.c.b16 %v397, %v396
  %v481 = vpack.c.b16 %v399, %v398
  %v482 = vpack.c.b16 %v401, %v400
  %v483 = vpack.c.b16 %v403, %v402
  %v484 = vpack.c.b16 %v405, %v404
  %v485 = vpack.c.b16 %v407, %v406
  %v486 = vpack.c.b16 %v409, %v408
  %v487 = vpack.c.b16 %v411, %v410
  %v488 = vpack.c.b16 %v413, %v412
  %v489 = vpack.c.b16 %v415, %v414
  %v490 = vpack.c.b16 %v417, %v416
  %v491 = vpack.c.b16 %v419, %v418
  %v492 = vpack.c.b16 %v421, %v420
  %v493 = vpack.c.b16 %v423, %v422
  %v494 = vpack.c.b16 %v425, %v424
  %v495 = vpack.c.b16 %v427, %v426
  %v496 = vpack.c.b16 %v429, %v428
  %v497 = vpack.c.b16 %v431, %v430
  %v498 = vpack.c.b16 %v433, %v432
  %v499 = vpack.c.b16 %v435, %v434
  %564 = vmatprep.subr.bf16.mxu0 0
  %565 = vmatpush1.bf16.msra.mxu0 %v443
  %566 = vmatprep.subr.bf16.mxu0 0
  %567 = vmatpush1.bf16.msra.mxu0 %v442
  %568 = vmatprep.subr.bf16.mxu0 0
  %569 = vmatpush1.bf16.msra.mxu0 %v441
  %570 = vmatprep.subr.bf16.mxu0 0
  %571 = vmatpush1.bf16.msra.mxu0 %v440
  %572 = vmatprep.subr.bf16.mxu0 0
  %573 = vmatpush1.bf16.msra.mxu0 %v439
  %574 = vmatprep.subr.bf16.mxu0 0
  %575 = vmatpush1.bf16.msra.mxu0 %v438
  %576 = vmatprep.subr.bf16.mxu0 0
  %577 = vmatpush1.bf16.msra.mxu0 %v437
  %578 = vmatprep.subr.bf16.mxu0 0
  %579 = vmatpush1.bf16.msra.mxu0 %v436
  %580 = vmatprep.subr.bf16.mxu0 0
  %581 = vmatpush2.bf16.msra.mxu0 %v451
  %582 = vmatprep.subr.bf16.mxu0 0
  %583 = vmatpush2.bf16.msra.mxu0 %v450
  %584 = vmatprep.subr.bf16.mxu0 0
  %585 = vmatpush2.bf16.msra.mxu0 %v449
  %586 = vmatprep.subr.bf16.mxu0 0
  %587 = vmatpush2.bf16.msra.mxu0 %v448
  %588 = vmatprep.subr.bf16.mxu0 0
  %589 = vmatpush2.bf16.msra.mxu0 %v447
  %590 = vmatprep.subr.bf16.mxu0 0
  %591 = vmatpush2.bf16.msra.mxu0 %v446
  %592 = vmatprep.subr.bf16.mxu0 0
  %593 = vmatpush2.bf16.msra.mxu0 %v445
  %594 = vmatprep.subr.bf16.mxu0 0
  %595 = vmatpush2.bf16.msra.mxu0 %v444
  %596 = vmatprep.mubr.bf16.mxu0 %v165
  %597 = vmatmul.mubr.bf16.gmra.mxu0 %v164
  %v598 = vpop.f32.mrf.mxu0
  %v599 = vadd.f32 %v151, %v598
  %v600 = vpop.f32.mrf.mxu0
  %v601 = vpop.f32.mrf.mxu0
  %v602 = vpop.f32.mrf.mxu0
  %603 = vdwg.mxu0
  %604 = vmatprep.subr.bf16.mxu0 0
  %605 = vmatpush1.bf16.msra.mxu0 %v459
  %606 = vmatprep.subr.bf16.mxu0 0
  %607 = vmatpush1.bf16.msra.mxu0 %v458
  %608 = vmatprep.subr.bf16.mxu0 0
  %609 = vmatpush1.bf16.msra.mxu0 %v457
  %610 = vmatprep.subr.bf16.mxu0 0
  %611 = vmatpush1.bf16.msra.mxu0 %v456
  %612 = vmatprep.subr.bf16.mxu0 0
  %613 = vmatpush1.bf16.msra.mxu0 %v455
  %614 = vmatprep.subr.bf16.mxu0 0
  %615 = vmatpush1.bf16.msra.mxu0 %v454
  %616 = vmatprep.subr.bf16.mxu0 0
  %617 = vmatpush1.bf16.msra.mxu0 %v453
  %618 = vmatprep.subr.bf16.mxu0 0
  %619 = vmatpush1.bf16.msra.mxu0 %v452
  %620 = vmatprep.subr.bf16.mxu0 0
  %621 = vmatpush2.bf16.msra.mxu0 %v467
  %622 = vmatprep.subr.bf16.mxu0 0
  %623 = vmatpush2.bf16.msra.mxu0 %v466
  %624 = vmatprep.subr.bf16.mxu0 0
  %625 = vmatpush2.bf16.msra.mxu0 %v465
  %626 = vmatprep.subr.bf16.mxu0 0
  %627 = vmatpush2.bf16.msra.mxu0 %v464
  %628 = vmatprep.subr.bf16.mxu0 0
  %629 = vmatpush2.bf16.msra.mxu0 %v463
  %630 = vmatprep.subr.bf16.mxu0 0
  %631 = vmatpush2.bf16.msra.mxu0 %v462
  %632 = vmatprep.subr.bf16.mxu0 0
  %633 = vmatpush2.bf16.msra.mxu0 %v461
  %634 = vmatprep.subr.bf16.mxu0 0
  %635 = vmatpush2.bf16.msra.mxu0 %v460
  %636 = vmatprep.mubr.bf16.mxu0 %v167
  %637 = vmatmul.mubr.bf16.gmra.mxu0 %v166
  %v638 = vpop.f32.mrf.mxu0
  %v639 = vadd.f32 %v599, %v638
  %v640 = vpop.f32.mrf.mxu0
  %v641 = vpop.f32.mrf.mxu0
  %v642 = vpop.f32.mrf.mxu0
  %643 = vdwg.mxu0
  %644 = vmatprep.subr.bf16.mxu0 0
  %645 = vmatpush1.bf16.msra.mxu0 %v475
  %646 = vmatprep.subr.bf16.mxu0 0
  %647 = vmatpush1.bf16.msra.mxu0 %v474
  %648 = vmatprep.subr.bf16.mxu0 0
  %649 = vmatpush1.bf16.msra.mxu0 %v473
  %650 = vmatprep.subr.bf16.mxu0 0
  %651 = vmatpush1.bf16.msra.mxu0 %v472
  %652 = vmatprep.subr.bf16.mxu0 0
  %653 = vmatpush1.bf16.msra.mxu0 %v471
  %654 = vmatprep.subr.bf16.mxu0 0
  %655 = vmatpush1.bf16.msra.mxu0 %v470
  %656 = vmatprep.subr.bf16.mxu0 0
  %657 = vmatpush1.bf16.msra.mxu0 %v469
  %658 = vmatprep.subr.bf16.mxu0 0
  %659 = vmatpush1.bf16.msra.mxu0 %v468
  %660 = vmatprep.subr.bf16.mxu0 0
  %661 = vmatpush2.bf16.msra.mxu0 %v483
  %662 = vmatprep.subr.bf16.mxu0 0
  %663 = vmatpush2.bf16.msra.mxu0 %v482
  %664 = vmatprep.subr.bf16.mxu0 0
  %665 = vmatpush2.bf16.msra.mxu0 %v481
  %666 = vmatprep.subr.bf16.mxu0 0
  %667 = vmatpush2.bf16.msra.mxu0 %v480
  %668 = vmatprep.subr.bf16.mxu0 0
  %669 = vmatpush2.bf16.msra.mxu0 %v479
  %670 = vmatprep.subr.bf16.mxu0 0
  %671 = vmatpush2.bf16.msra.mxu0 %v478
  %672 = vmatprep.subr.bf16.mxu0 0
  %673 = vmatpush2.bf16.msra.mxu0 %v477
  %674 = vmatprep.subr.bf16.mxu0 0
  %675 = vmatpush2.bf16.msra.mxu0 %v476
  %676 = vmatprep.mubr.bf16.mxu0 %v169
  %677 = vmatmul.mubr.bf16.gmra.mxu0 %v168
  %v678 = vpop.f32.mrf.mxu0
  %v679 = vadd.f32 %v639, %v678
  %v680 = vpop.f32.mrf.mxu0
  %v681 = vpop.f32.mrf.mxu0
  %v682 = vpop.f32.mrf.mxu0
  %683 = vdwg.mxu0
  %684 = vmatprep.subr.bf16.mxu0 0
  %685 = vmatpush1.bf16.msra.mxu0 %v491
  %686 = vmatprep.subr.bf16.mxu0 0
  %687 = vmatpush1.bf16.msra.mxu0 %v490
  %688 = vmatprep.subr.bf16.mxu0 0
  %689 = vmatpush1.bf16.msra.mxu0 %v489
  %690 = vmatprep.subr.bf16.mxu0 0
  %691 = vmatpush1.bf16.msra.mxu0 %v488
  %692 = vmatprep.subr.bf16.mxu0 0
  %693 = vmatpush1.bf16.msra.mxu0 %v487
  %694 = vmatprep.subr.bf16.mxu0 0
  %695 = vmatpush1.bf16.msra.mxu0 %v486
  %696 = vmatprep.subr.bf16.mxu0 0
  %697 = vmatpush1.bf16.msra.mxu0 %v485
  %698 = vmatprep.subr.bf16.mxu0 0
  %699 = vmatpush1.bf16.msra.mxu0 %v484
  %700 = vmatprep.subr.bf16.mxu0 0
  %701 = vmatpush2.bf16.msra.mxu0 %v499
  %702 = vmatprep.subr.bf16.mxu0 0
  %703 = vmatpush2.bf16.msra.mxu0 %v498
  %704 = vmatprep.subr.bf16.mxu0 0
  %705 = vmatpush2.bf16.msra.mxu0 %v497
  %706 = vmatprep.subr.bf16.mxu0 0
  %707 = vmatpush2.bf16.msra.mxu0 %v496
  %708 = vmatprep.subr.bf16.mxu0 0
  %709 = vmatpush2.bf16.msra.mxu0 %v495
  %710 = vmatprep.subr.bf16.mxu0 0
  %711 = vmatpush2.bf16.msra.mxu0 %v494
  %712 = vmatprep.subr.bf16.mxu0 0
  %713 = vmatpush2.bf16.msra.mxu0 %v493
  %714 = vmatprep.subr.bf16.mxu0 0
  %715 = vmatpush2.bf16.msra.mxu0 %v492
  %716 = vmatprep.mubr.bf16.mxu0 %v171
  %717 = vmatmul.mubr.bf16.gmra.mxu0 %v170
  %v718 = vpop.f32.mrf.mxu0
  %v719 = vadd.f32 %v679, %v718
  %v720 = vpop.f32.mrf.mxu0
  %v721 = vpop.f32.mrf.mxu0
  %v722 = vpop.f32.mrf.mxu0
  %723 = vdwg.mxu0
  %v724 = vld [vmem:[%s2 + $0x18] sm:$0xff]
  %v725 = vld [vmem:[%s2 + $0x20] sm:$0xff]
  %v726 = vld [vmem:[%s2 + $0x28] sm:$0xff]
  %v727 = vld [vmem:[%s2 + $0x30] sm:$0xff]
  %v728 = vld [vmem:[%s2 + $0x38] sm:$0xff]
  %v729 = vld [vmem:[%s2 + $0x40] sm:$0xff]
  %v730 = vld [vmem:[%s2 + $0x48] sm:$0xff]
  %v731 = vld [vmem:[%s2 + $0x50] sm:$0xff]
  %v732 = vld [vmem:[%s2 + $0x58] sm:$0x1]
  %v733 = vlaneseq
  %v734 = vshrl.u32 %v733, 7
  %v735 = vsub.s32 0, %v734
  %v736 = vrot.slane %v732, %v735
  %vm737 = vcmask 261120
  %v739 = vsel %vm737, %v719, 0
  %741 = vmatprep.subr.mxu0 0.0
  %742 = vmatpush1.msra.mxu0 0.0
  %743 = vmatprep.subr.mxu0 0.0
  %744 = vmatpush1.msra.mxu0 0.0
  %745 = vmatprep.subr.mxu0 0.0
  %746 = vmatpush1.msra.mxu0 0.0
  %747 = vmatprep.subr.mxu0 0.0
  %748 = vmatpush1.msra.mxu0 0.0
  %749 = vmatprep.subr.mxu0 0.0
  %750 = vmatpush1.msra.mxu0 0.0
  %751 = vmatprep.subr.mxu0 0.0
  %752 = vmatpush1.msra.mxu0 0.0
  %753 = vmatprep.subr.mxu0 0.0
  %754 = vmatpush1.msra.mxu0 0.0
  %755 = vmatprep.subr.mxu0 0.0
  %756 = vmatpush1.msra.mxu0 0.0
  %757 = vmatprep.subr.mxu0 0.0
  %758 = vmatpush1.msra.mxu0 0.0
  %759 = vmatprep.subr.mxu0 0.0
  %760 = vmatpush1.msra.mxu0 0.0
  %761 = vmatprep.subr.mxu0 0.0
  %762 = vmatpush1.msra.mxu0 0.0
  %763 = vmatprep.subr.mxu0 0.0
  %764 = vmatpush1.msra.mxu0 0.0
  %765 = vmatprep.subr.mxu0 0.0
  %766 = vmatpush1.msra.mxu0 %v731
  %767 = vmatprep.subr.mxu0 0.0
  %768 = vmatpush1.msra.mxu0 %v730
  %769 = vmatprep.subr.mxu0 0.0
  %770 = vmatpush1.msra.mxu0 %v729
  %771 = vmatprep.subr.mxu0 0.0
  %772 = vmatpush1.msra.mxu0 %v728
  %773 = vmatprep.subr.mxu0 0.0
  %774 = vmatpush2.msra.mxu0 0.0
  %775 = vmatprep.subr.mxu0 0.0
  %776 = vmatpush2.msra.mxu0 0.0
  %777 = vmatprep.subr.mxu0 0.0
  %778 = vmatpush2.msra.mxu0 0.0
  %779 = vmatprep.subr.mxu0 0.0
  %780 = vmatpush2.msra.mxu0 0.0
  %781 = vmatprep.subr.mxu0 0.0
  %782 = vmatpush2.msra.mxu0 0.0
  %783 = vmatprep.subr.mxu0 0.0
  %784 = vmatpush2.msra.mxu0 0.0
  %785 = vmatprep.subr.mxu0 0.0
  %786 = vmatpush2.msra.mxu0 0.0
  %787 = vmatprep.subr.mxu0 0.0
  %788 = vmatpush2.msra.mxu0 0.0
  %789 = vmatprep.subr.mxu0 0.0
  %790 = vmatpush2.msra.mxu0 0.0
  %791 = vmatprep.subr.mxu0 0.0
  %792 = vmatpush2.msra.mxu0 0.0
  %793 = vmatprep.subr.mxu0 0.0
  %794 = vmatpush2.msra.mxu0 0.0
  %795 = vmatprep.subr.mxu0 0.0
  %796 = vmatpush2.msra.mxu0 0.0
  %797 = vmatprep.subr.mxu0 0.0
  %798 = vmatpush2.msra.mxu0 0.0
  %799 = vmatprep.subr.mxu0 0.0
  %800 = vmatpush2.msra.mxu0 0.0
  %801 = vmatprep.subr.mxu0 0.0
  %802 = vmatpush2.msra.mxu0 0.0
  %803 = vmatprep.subr.mxu0 0.0
  %804 = vmatpush2.msra.mxu0 0.0
  %805 = vmatprep.mubr.f32.mxu0 0.0
  %806 = vmatmul.mubr.f32.gmra.mxu0 %v739
  %v807 = vpop.f32.mrf.mxu0
  %v808 = vadd.f32 %v736, %v807
  %v809 = vpop.f32.mrf.mxu0
  %810 = vdwg.mxu0
  %815 = vrot.lane.b32.xlu0 %v724, 32
  %v816 = vpop.permute.xlu0 %815
  %817 = vrot.lane.b32.xlu0 %v725, 32
  %v818 = vpop.permute.xlu0 %817
  %819 = vrot.lane.b32.xlu0 %v726, 32
  %v820 = vpop.permute.xlu0 %819
  %821 = vrot.lane.b32.xlu0 %v727, 32
  %v822 = vpop.permute.xlu0 %821
  %v827 = vmul.f32 %v808, %v816
  %v828 = vmul.f32 %v808, %v818
  %v829 = vmul.f32 %v808, %v820
  %v830 = vmul.f32 %v808, %v822
  %831 = vrot.lane.b32.xlu0 %v724, 64
  %v832 = vpop.permute.xlu0 %831
  %833 = vrot.lane.b32.xlu0 %v725, 64
  %v834 = vpop.permute.xlu0 %833
  %835 = vrot.lane.b32.xlu0 %v726, 64
  %v836 = vpop.permute.xlu0 %835
  %837 = vrot.lane.b32.xlu0 %v727, 64
  %v838 = vpop.permute.xlu0 %837
  %v843 = vmul.f32 %v808, %v832
  %v844 = vmul.f32 %v808, %v834
  %v845 = vmul.f32 %v808, %v836
  %v846 = vmul.f32 %v808, %v838
  %851 = vrot.lane.b32.xlu0 %v827, 96
  %v852 = vpop.permute.xlu0 %851
  %853 = vrot.lane.b32.xlu0 %v828, 96
  %v854 = vpop.permute.xlu0 %853
  %855 = vrot.lane.b32.xlu0 %v829, 96
  %v856 = vpop.permute.xlu0 %855
  %857 = vrot.lane.b32.xlu0 %v830, 96
  %v858 = vpop.permute.xlu0 %857
  %v860 = vsel %vm737, %v808, 0
  %v862 = vsel %vm737, %v852, 0
  %v864 = vsel %vm737, %v854, 0
  %v866 = vsel %vm737, %v856, 0
  %v868 = vsel %vm737, %v858, 0
  %870 = vmatprep.subr.mxu0 0.0
  %871 = vmatpush1.xpose.msra.mxu0 0.0
  %872 = vmatprep.subr.mxu0 0.0
  %873 = vmatpush1.xpose.msra.mxu0 0.0
  %874 = vmatprep.subr.mxu0 0.0
  %875 = vmatpush1.xpose.msra.mxu0 0.0
  %876 = vmatprep.subr.mxu0 0.0
  %877 = vmatpush1.xpose.msra.mxu0 0.0
  %878 = vmatprep.subr.mxu0 0.0
  %879 = vmatpush1.xpose.msra.mxu0 0.0
  %880 = vmatprep.subr.mxu0 0.0
  %881 = vmatpush1.xpose.msra.mxu0 0.0
  %882 = vmatprep.subr.mxu0 0.0
  %883 = vmatpush1.xpose.msra.mxu0 0.0
  %884 = vmatprep.subr.mxu0 0.0
  %885 = vmatpush1.xpose.msra.mxu0 0.0
  %886 = vmatprep.subr.mxu0 0.0
  %887 = vmatpush1.xpose.msra.mxu0 0.0
  %888 = vmatprep.subr.mxu0 0.0
  %889 = vmatpush1.xpose.msra.mxu0 0.0
  %890 = vmatprep.subr.mxu0 0.0
  %891 = vmatpush1.xpose.msra.mxu0 0.0
  %892 = vmatprep.subr.mxu0 0.0
  %893 = vmatpush1.xpose.msra.mxu0 0.0
  %894 = vmatprep.subr.mxu0 0.0
  %895 = vmatpush1.xpose.msra.mxu0 %v868
  %896 = vmatprep.subr.mxu0 0.0
  %897 = vmatpush1.xpose.msra.mxu0 %v866
  %898 = vmatprep.subr.mxu0 0.0
  %899 = vmatpush1.xpose.msra.mxu0 %v864
  %900 = vmatprep.subr.mxu0 0.0
  %901 = vmatpush1.xpose.msra.mxu0 %v862
  %902 = vmatprep.subr.mxu0 0.0
  %903 = vmatpush2.xpose.msra.mxu0 0.0
  %904 = vmatprep.subr.mxu0 0.0
  %905 = vmatpush2.xpose.msra.mxu0 0.0
  %906 = vmatprep.subr.mxu0 0.0
  %907 = vmatpush2.xpose.msra.mxu0 0.0
  %908 = vmatprep.subr.mxu0 0.0
  %909 = vmatpush2.xpose.msra.mxu0 0.0
  %910 = vmatprep.subr.mxu0 0.0
  %911 = vmatpush2.xpose.msra.mxu0 0.0
  %912 = vmatprep.subr.mxu0 0.0
  %913 = vmatpush2.xpose.msra.mxu0 0.0
  %914 = vmatprep.subr.mxu0 0.0
  %915 = vmatpush2.xpose.msra.mxu0 0.0
  %916 = vmatprep.subr.mxu0 0.0
  %917 = vmatpush2.xpose.msra.mxu0 0.0
  %918 = vmatprep.subr.mxu0 0.0
  %919 = vmatpush2.xpose.msra.mxu0 0.0
  %920 = vmatprep.subr.mxu0 0.0
  %921 = vmatpush2.xpose.msra.mxu0 0.0
  %922 = vmatprep.subr.mxu0 0.0
  %923 = vmatpush2.xpose.msra.mxu0 0.0
  %924 = vmatprep.subr.mxu0 0.0
  %925 = vmatpush2.xpose.msra.mxu0 0.0
  %926 = vmatprep.subr.mxu0 0.0
  %927 = vmatpush2.xpose.msra.mxu0 0.0
  %928 = vmatprep.subr.mxu0 0.0
  %929 = vmatpush2.xpose.msra.mxu0 0.0
  %930 = vmatprep.subr.mxu0 0.0
  %931 = vmatpush2.xpose.msra.mxu0 0.0
  %932 = vmatprep.subr.mxu0 0.0
  %933 = vmatpush2.xpose.msra.mxu0 0.0
  %934 = vmatprep.mubr.f32.mxu0 0.0
  %935 = vmatmul.mubr.f32.gmra.mxu0 %v860
  %v936 = vpop.f32.mrf.mxu0
  %v937 = vadd.f32 0.0, %v936
  %v938 = vpop.f32.mrf.mxu0
  %939 = vdwg.mxu0
  %v940 = vsel %vm737, %v937, -inf
  %941 = vmax.xlane.f32.xlu0 %v940
  %v942 = vpop.xlane.xlu0 %941
  %v943 = vsub.f32 %v937, %v942
  %v944 = vmul.f32 %v943, 1.442695
  %v945 = vpow.pop %v944
  %v947 = vsel %vm737, %v945, 0
  %949 = vmatprep.subr.mxu0 0.0
  %950 = vmatpush1.msra.mxu0 0.0
  %951 = vmatprep.subr.mxu0 0.0
  %952 = vmatpush1.msra.mxu0 0.0
  %953 = vmatprep.subr.mxu0 0.0
  %954 = vmatpush1.msra.mxu0 0.0
  %955 = vmatprep.subr.mxu0 0.0
  %956 = vmatpush1.msra.mxu0 0.0
  %957 = vmatprep.subr.mxu0 0.0
  %958 = vmatpush1.msra.mxu0 0.0
  %959 = vmatprep.subr.mxu0 0.0
  %960 = vmatpush1.msra.mxu0 0.0
  %961 = vmatprep.subr.mxu0 0.0
  %962 = vmatpush1.msra.mxu0 0.0
  %963 = vmatprep.subr.mxu0 0.0
  %964 = vmatpush1.msra.mxu0 0.0
  %965 = vmatprep.subr.mxu0 0.0
  %966 = vmatpush1.msra.mxu0 0.0
  %967 = vmatprep.subr.mxu0 0.0
  %968 = vmatpush1.msra.mxu0 0.0
  %969 = vmatprep.subr.mxu0 0.0
  %970 = vmatpush1.msra.mxu0 0.0
  %971 = vmatprep.subr.mxu0 0.0
  %972 = vmatpush1.msra.mxu0 0.0
  %973 = vmatprep.subr.mxu0 0.0
  %974 = vmatpush1.msra.mxu0 %v727
  %975 = vmatprep.subr.mxu0 0.0
  %976 = vmatpush1.msra.mxu0 %v726
  %977 = vmatprep.subr.mxu0 0.0
  %978 = vmatpush1.msra.mxu0 %v725
  %979 = vmatprep.subr.mxu0 0.0
  %980 = vmatpush1.msra.mxu0 %v724
  %981 = vmatprep.subr.mxu0 0.0
  %982 = vmatpush2.msra.mxu0 0.0
  %983 = vmatprep.subr.mxu0 0.0
  %984 = vmatpush2.msra.mxu0 0.0
  %985 = vmatprep.subr.mxu0 0.0
  %986 = vmatpush2.msra.mxu0 0.0
  %987 = vmatprep.subr.mxu0 0.0
  %988 = vmatpush2.msra.mxu0 0.0
  %989 = vmatprep.subr.mxu0 0.0
  %990 = vmatpush2.msra.mxu0 0.0
  %991 = vmatprep.subr.mxu0 0.0
  %992 = vmatpush2.msra.mxu0 0.0
  %993 = vmatprep.subr.mxu0 0.0
  %994 = vmatpush2.msra.mxu0 0.0
  %995 = vmatprep.subr.mxu0 0.0
  %996 = vmatpush2.msra.mxu0 0.0
  %997 = vmatprep.subr.mxu0 0.0
  %998 = vmatpush2.msra.mxu0 0.0
  %999 = vmatprep.subr.mxu0 0.0
  %1000 = vmatpush2.msra.mxu0 0.0
  %1001 = vmatprep.subr.mxu0 0.0
  %1002 = vmatpush2.msra.mxu0 0.0
  %1003 = vmatprep.subr.mxu0 0.0
  %1004 = vmatpush2.msra.mxu0 0.0
  %1005 = vmatprep.subr.mxu0 0.0
  %1006 = vmatpush2.msra.mxu0 0.0
  %1007 = vmatprep.subr.mxu0 0.0
  %1008 = vmatpush2.msra.mxu0 0.0
  %1009 = vmatprep.subr.mxu0 0.0
  %1010 = vmatpush2.msra.mxu0 0.0
  %1011 = vmatprep.subr.mxu0 0.0
  %1012 = vmatpush2.msra.mxu0 0.0
  %1013 = vmatprep.mubr.f32.mxu0 0.0
  %1014 = vmatmul.mubr.f32.gmra.mxu0 %v947
  %v1015 = vpop.f32.mrf.mxu0
  %v1016 = vadd.f32 0.0, %v1015
  %v1017 = vpop.f32.mrf.mxu0
  %1018 = vdwg.mxu0
  %v1019 = vrcp.pop %v1016
  %v1020 = vmul.f32 %v945, %v1019
  %1025 = vrot.lane.b32.xlu0 %v843, 64
  %v1026 = vpop.permute.xlu0 %1025
  %1027 = vrot.lane.b32.xlu0 %v844, 64
  %v1028 = vpop.permute.xlu0 %1027
  %1029 = vrot.lane.b32.xlu0 %v845, 64
  %v1030 = vpop.permute.xlu0 %1029
  %1031 = vrot.lane.b32.xlu0 %v846, 64
  %v1032 = vpop.permute.xlu0 %1031
  %v1038 = vsel %vm737, %v1020, 0
  %1040 = vmatprep.subr.mxu0 0.0
  %1041 = vmatpush1.msra.mxu0 0.0
  %1042 = vmatprep.subr.mxu0 0.0
  %1043 = vmatpush1.msra.mxu0 0.0
  %1044 = vmatprep.subr.mxu0 0.0
  %1045 = vmatpush1.msra.mxu0 0.0
  %1046 = vmatprep.subr.mxu0 0.0
  %1047 = vmatpush1.msra.mxu0 0.0
  %1048 = vmatprep.subr.mxu0 0.0
  %1049 = vmatpush1.msra.mxu0 0.0
  %1050 = vmatprep.subr.mxu0 0.0
  %1051 = vmatpush1.msra.mxu0 0.0
  %1052 = vmatprep.subr.mxu0 0.0
  %1053 = vmatpush1.msra.mxu0 0.0
  %1054 = vmatprep.subr.mxu0 0.0
  %1055 = vmatpush1.msra.mxu0 0.0
  %1056 = vmatprep.subr.mxu0 0.0
  %1057 = vmatpush1.msra.mxu0 0.0
  %1058 = vmatprep.subr.mxu0 0.0
  %1059 = vmatpush1.msra.mxu0 0.0
  %1060 = vmatprep.subr.mxu0 0.0
  %1061 = vmatpush1.msra.mxu0 0.0
  %1062 = vmatprep.subr.mxu0 0.0
  %1063 = vmatpush1.msra.mxu0 0.0
  %1064 = vmatprep.subr.mxu0 0.0
  %1065 = vmatpush1.msra.mxu0 %v1032
  %1066 = vmatprep.subr.mxu0 0.0
  %1067 = vmatpush1.msra.mxu0 %v1030
  %1068 = vmatprep.subr.mxu0 0.0
  %1069 = vmatpush1.msra.mxu0 %v1028
  %1070 = vmatprep.subr.mxu0 0.0
  %1071 = vmatpush1.msra.mxu0 %v1026
  %1072 = vmatprep.subr.mxu0 0.0
  %1073 = vmatpush2.msra.mxu0 0.0
  %1074 = vmatprep.subr.mxu0 0.0
  %1075 = vmatpush2.msra.mxu0 0.0
  %1076 = vmatprep.subr.mxu0 0.0
  %1077 = vmatpush2.msra.mxu0 0.0
  %1078 = vmatprep.subr.mxu0 0.0
  %1079 = vmatpush2.msra.mxu0 0.0
  %1080 = vmatprep.subr.mxu0 0.0
  %1081 = vmatpush2.msra.mxu0 0.0
  %1082 = vmatprep.subr.mxu0 0.0
  %1083 = vmatpush2.msra.mxu0 0.0
  %1084 = vmatprep.subr.mxu0 0.0
  %1085 = vmatpush2.msra.mxu0 0.0
  %1086 = vmatprep.subr.mxu0 0.0
  %1087 = vmatpush2.msra.mxu0 0.0
  %1088 = vmatprep.subr.mxu0 0.0
  %1089 = vmatpush2.msra.mxu0 0.0
  %1090 = vmatprep.subr.mxu0 0.0
  %1091 = vmatpush2.msra.mxu0 0.0
  %1092 = vmatprep.subr.mxu0 0.0
  %1093 = vmatpush2.msra.mxu0 0.0
  %1094 = vmatprep.subr.mxu0 0.0
  %1095 = vmatpush2.msra.mxu0 0.0
  %1096 = vmatprep.subr.mxu0 0.0
  %1097 = vmatpush2.msra.mxu0 0.0
  %1098 = vmatprep.subr.mxu0 0.0
  %1099 = vmatpush2.msra.mxu0 0.0
  %1100 = vmatprep.subr.mxu0 0.0
  %1101 = vmatpush2.msra.mxu0 0.0
  %1102 = vmatprep.subr.mxu0 0.0
  %1103 = vmatpush2.msra.mxu0 0.0
  %1104 = vmatprep.mubr.f32.mxu0 0.0
  %1105 = vmatmul.mubr.f32.gmra.mxu0 %v1038
  %v1106 = vpop.f32.mrf.mxu0
  %v1107 = vadd.f32 0.0, %v1106
  %v1108 = vpop.f32.mrf.mxu0
  %1109 = vdwg.mxu0
  %v1110 = vld [vmem:[%s2 + $0x60] sm:$0xff]
  %v1111 = vld [vmem:[%s2 + $0x68] sm:$0xff]
  %v1112 = vld [vmem:[%s2 + $0x70] sm:$0xff]
  %v1113 = vld [vmem:[%s2 + $0x78] sm:$0xff]
  %v1114 = vld [vmem:[%s2 + $0x80] sm:$0x1]
  %v1115 = vlaneseq
  %v1116 = vshrl.u32 %v1115, 7
  %v1117 = vsub.s32 0, %v1116
  %v1118 = vrot.slane %v1114, %v1117
  %v1120 = vsel %vm737, %v1107, 0
  %1122 = vmatprep.subr.mxu0 0.0
  %1123 = vmatpush1.msra.mxu0 0.0
  %1124 = vmatprep.subr.mxu0 0.0
  %1125 = vmatpush1.msra.mxu0 0.0
  %1126 = vmatprep.subr.mxu0 0.0
  %1127 = vmatpush1.msra.mxu0 0.0
  %1128 = vmatprep.subr.mxu0 0.0
  %1129 = vmatpush1.msra.mxu0 0.0
  %1130 = vmatprep.subr.mxu0 0.0
  %1131 = vmatpush1.msra.mxu0 0.0
  %1132 = vmatprep.subr.mxu0 0.0
  %1133 = vmatpush1.msra.mxu0 0.0
  %1134 = vmatprep.subr.mxu0 0.0
  %1135 = vmatpush1.msra.mxu0 0.0
  %1136 = vmatprep.subr.mxu0 0.0
  %1137 = vmatpush1.msra.mxu0 0.0
  %1138 = vmatprep.subr.mxu0 0.0
  %1139 = vmatpush1.msra.mxu0 0.0
  %1140 = vmatprep.subr.mxu0 0.0
  %1141 = vmatpush1.msra.mxu0 0.0
  %1142 = vmatprep.subr.mxu0 0.0
  %1143 = vmatpush1.msra.mxu0 0.0
  %1144 = vmatprep.subr.mxu0 0.0
  %1145 = vmatpush1.msra.mxu0 0.0
  %1146 = vmatprep.subr.mxu0 0.0
  %1147 = vmatpush1.msra.mxu0 %v1113
  %1148 = vmatprep.subr.mxu0 0.0
  %1149 = vmatpush1.msra.mxu0 %v1112
  %1150 = vmatprep.subr.mxu0 0.0
  %1151 = vmatpush1.msra.mxu0 %v1111
  %1152 = vmatprep.subr.mxu0 0.0
  %1153 = vmatpush1.msra.mxu0 %v1110
  %1154 = vmatprep.subr.mxu0 0.0
  %1155 = vmatpush2.msra.mxu0 0.0
  %1156 = vmatprep.subr.mxu0 0.0
  %1157 = vmatpush2.msra.mxu0 0.0
  %1158 = vmatprep.subr.mxu0 0.0
  %1159 = vmatpush2.msra.mxu0 0.0
  %1160 = vmatprep.subr.mxu0 0.0
  %1161 = vmatpush2.msra.mxu0 0.0
  %1162 = vmatprep.subr.mxu0 0.0
  %1163 = vmatpush2.msra.mxu0 0.0
  %1164 = vmatprep.subr.mxu0 0.0
  %1165 = vmatpush2.msra.mxu0 0.0
  %1166 = vmatprep.subr.mxu0 0.0
  %1167 = vmatpush2.msra.mxu0 0.0
  %1168 = vmatprep.subr.mxu0 0.0
  %1169 = vmatpush2.msra.mxu0 0.0
  %1170 = vmatprep.subr.mxu0 0.0
  %1171 = vmatpush2.msra.mxu0 0.0
  %1172 = vmatprep.subr.mxu0 0.0
  %1173 = vmatpush2.msra.mxu0 0.0
  %1174 = vmatprep.subr.mxu0 0.0
  %1175 = vmatpush2.msra.mxu0 0.0
  %1176 = vmatprep.subr.mxu0 0.0
  %1177 = vmatpush2.msra.mxu0 0.0
  %1178 = vmatprep.subr.mxu0 0.0
  %1179 = vmatpush2.msra.mxu0 0.0
  %1180 = vmatprep.subr.mxu0 0.0
  %1181 = vmatpush2.msra.mxu0 0.0
  %1182 = vmatprep.subr.mxu0 0.0
  %1183 = vmatpush2.msra.mxu0 0.0
  %1184 = vmatprep.subr.mxu0 0.0
  %1185 = vmatpush2.msra.mxu0 0.0
  %1186 = vmatprep.mubr.f32.mxu0 0.0
  %1187 = vmatmul.mubr.f32.gmra.mxu0 %v1120
  %v1188 = vpop.f32.mrf.mxu0
  %v1189 = vadd.f32 %v1118, %v1188
  %v1190 = vpop.f32.mrf.mxu0
  %1191 = vdwg.mxu0
  %v1192 = vadd.f32 %v719, %v1189
  %v1193 = vld [vmem:[%s2 + $0x88] sm:$0x1]
  %v1194 = vld [vmem:[%s2 + $0x90] sm:$0x1]
  %v1195 = vsel %vm737, %v1192, 0.0
  %1196 = vadd.xlane.f32.xlu0 %v1195
  %v1197 = vpop.xlane.xlu0 %1196
  %v1198 = vrcp.pop 32.0
  %v1199 = vmul.f32 %v1197, %v1198
  %v1200 = vsub.f32 %v1192, %v1199
  %v1201 = vmul.f32 %v1200, %v1200
  %v1202 = vsel %vm737, %v1201, 0.0
  %1203 = vadd.xlane.f32.xlu0 %v1202
  %v1204 = vpop.xlane.xlu0 %1203
  %v1205 = vmul.f32 %v1204, %v1198
  %v1206 = vadd.f32 %v1205, 1e-05
  %v1207 = vrsqrt.pop %v1206
  %v1208 = vmul.f32 %v1200, %v1207
  %v1209 = vlaneseq
  %v1210 = vshrl.u32 %v1209, 7
  %v1211 = vsub.s32 0, %v1210
  %v1212 = vrot.slane %v1193, %v1211
  %v1213 = vmul.f32 %v1208, %v1212
  %v1214 = vlaneseq
  %v1215 = vshrl.u32 %v1214, 7
  %v1216 = vsub.s32 0, %v1215
  %v1217 = vrot.slane %v1194, %v1216
  %v1218 = vadd.f32 %v1213, %v1217
  %v1219 = vld [vmem:[%s2 + $0x98] sm:$0xff]
  %v1220 = vld [vmem:[%s2 + $0xa0] sm:$0xff]
  %v1221 = vld [vmem:[%s2 + $0xa8] sm:$0xff]
  %v1222 = vld [vmem:[%s2 + $0xb0] sm:$0xff]
  %v1223 = vld [vmem:[%s2 + $0xb8] sm:$0x1]
  %v1224 = vlaneseq
  %v1225 = vshrl.u32 %v1224, 7
  %v1226 = vsub.s32 0, %v1225
  %v1227 = vrot.slane %v1223, %v1226
  %v1229 = vsel %vm737, %v1218, 0
  %1231 = vmatprep.subr.mxu0 0.0
  %1232 = vmatpush1.msra.mxu0 0.0
  %1233 = vmatprep.subr.mxu0 0.0
  %1234 = vmatpush1.msra.mxu0 0.0
  %1235 = vmatprep.subr.mxu0 0.0
  %1236 = vmatpush1.msra.mxu0 0.0
  %1237 = vmatprep.subr.mxu0 0.0
  %1238 = vmatpush1.msra.mxu0 0.0
  %1239 = vmatprep.subr.mxu0 0.0
  %1240 = vmatpush1.msra.mxu0 0.0
  %1241 = vmatprep.subr.mxu0 0.0
  %1242 = vmatpush1.msra.mxu0 0.0
  %1243 = vmatprep.subr.mxu0 0.0
  %1244 = vmatpush1.msra.mxu0 0.0
  %1245 = vmatprep.subr.mxu0 0.0
  %1246 = vmatpush1.msra.mxu0 0.0
  %1247 = vmatprep.subr.mxu0 0.0
  %1248 = vmatpush1.msra.mxu0 0.0
  %1249 = vmatprep.subr.mxu0 0.0
  %1250 = vmatpush1.msra.mxu0 0.0
  %1251 = vmatprep.subr.mxu0 0.0
  %1252 = vmatpush1.msra.mxu0 0.0
  %1253 = vmatprep.subr.mxu0 0.0
  %1254 = vmatpush1.msra.mxu0 0.0
  %1255 = vmatprep.subr.mxu0 0.0
  %1256 = vmatpush1.msra.mxu0 %v1222
  %1257 = vmatprep.subr.mxu0 0.0
  %1258 = vmatpush1.msra.mxu0 %v1221
  %1259 = vmatprep.subr.mxu0 0.0
  %1260 = vmatpush1.msra.mxu0 %v1220
  %1261 = vmatprep.subr.mxu0 0.0
  %1262 = vmatpush1.msra.mxu0 %v1219
  %1263 = vmatprep.subr.mxu0 0.0
  %1264 = vmatpush2.msra.mxu0 0.0
  %1265 = vmatprep.subr.mxu0 0.0
  %1266 = vmatpush2.msra.mxu0 0.0
  %1267 = vmatprep.subr.mxu0 0.0
  %1268 = vmatpush2.msra.mxu0 0.0
  %1269 = vmatprep.subr.mxu0 0.0
  %1270 = vmatpush2.msra.mxu0 0.0
  %1271 = vmatprep.subr.mxu0 0.0
  %1272 = vmatpush2.msra.mxu0 0.0
  %1273 = vmatprep.subr.mxu0 0.0
  %1274 = vmatpush2.msra.mxu0 0.0
  %1275 = vmatprep.subr.mxu0 0.0
  %1276 = vmatpush2.msra.mxu0 0.0
  %1277 = vmatprep.subr.mxu0 0.0
  %1278 = vmatpush2.msra.mxu0 0.0
  %1279 = vmatprep.subr.mxu0 0.0
  %1280 = vmatpush2.msra.mxu0 0.0
  %1281 = vmatprep.subr.mxu0 0.0
  %1282 = vmatpush2.msra.mxu0 0.0
  %1283 = vmatprep.subr.mxu0 0.0
  %1284 = vmatpush2.msra.mxu0 0.0
  %1285 = vmatprep.subr.mxu0 0.0
  %1286 = vmatpush2.msra.mxu0 0.0
  %1287 = vmatprep.subr.mxu0 0.0
  %1288 = vmatpush2.msra.mxu0 0.0
  %1289 = vmatprep.subr.mxu0 0.0
  %1290 = vmatpush2.msra.mxu0 0.0
  %1291 = vmatprep.subr.mxu0 0.0
  %1292 = vmatpush2.msra.mxu0 0.0
  %1293 = vmatprep.subr.mxu0 0.0
  %1294 = vmatpush2.msra.mxu0 0.0
  %1295 = vmatprep.mubr.f32.mxu0 0.0
  %1296 = vmatmul.mubr.f32.gmra.mxu0 %v1229
  %v1297 = vpop.f32.mrf.mxu0
  %v1298 = vadd.f32 %v1227, %v1297
  %v1299 = vpop.f32.mrf.mxu0
  %1300 = vdwg.mxu0
  %v1301 = vmax.f32 %v1298, 0.0
  %v1302 = vld [vmem:[%s2 + $0xc0] sm:$0xff]
  %v1303 = vld [vmem:[%s2 + $0xc8] sm:$0xff]
  %v1304 = vld [vmem:[%s2 + $0xd0] sm:$0xff]
  %v1305 = vld [vmem:[%s2 + $0xd8] sm:$0xff]
  %v1306 = vld [vmem:[%s2 + $0xe0] sm:$0xff]
  %v1307 = vld [vmem:[%s2 + $0xe8] sm:$0xff]
  %v1308 = vld [vmem:[%s2 + $0xf0] sm:$0xff]
  %v1309 = vld [vmem:[%s2 + $0xf8] sm:$0xff]
  %v1310 = vld [vmem:[%s2 + $0x100] sm:$0x1]
  %v1311 = vlaneseq
  %v1312 = vshrl.u32 %v1311, 7
  %v1313 = vsub.s32 0, %v1312
  %v1314 = vrot.slane %v1310, %v1313
  %vm1315 = vcmask 523264
  %v1317 = vsel %vm1315, %v1301, 0
  %1319 = vmatprep.subr.mxu0 0.0
  %1320 = vmatpush1.msra.mxu0 0.0
  %1321 = vmatprep.subr.mxu0 0.0
  %1322 = vmatpush1.msra.mxu0 0.0
  %1323 = vmatprep.subr.mxu0 0.0
  %1324 = vmatpush1.msra.mxu0 0.0
  %1325 = vmatprep.subr.mxu0 0.0
  %1326 = vmatpush1.msra.mxu0 0.0
  %1327 = vmatprep.subr.mxu0 0.0
  %1328 = vmatpush1.msra.mxu0 0.0
  %1329 = vmatprep.subr.mxu0 0.0
  %1330 = vmatpush1.msra.mxu0 0.0
  %1331 = vmatprep.subr.mxu0 0.0
  %1332 = vmatpush1.msra.mxu0 0.0
  %1333 = vmatprep.subr.mxu0 0.0
  %1334 = vmatpush1.msra.mxu0 0.0
  %1335 = vmatprep.subr.mxu0 0.0
  %1336 = vmatpush1.msra.mxu0 %v1309
  %1337 = vmatprep.subr.mxu0 0.0
  %1338 = vmatpush1.msra.mxu0 %v1308
  %1339 = vmatprep.subr.mxu0 0.0
  %1340 = vmatpush1.msra.mxu0 %v1307
  %1341 = vmatprep.subr.mxu0 0.0
  %1342 = vmatpush1.msra.mxu0 %v1306
  %1343 = vmatprep.subr.mxu0 0.0
  %1344 = vmatpush1.msra.mxu0 %v1305
  %1345 = vmatprep.subr.mxu0 0.0
  %1346 = vmatpush1.msra.mxu0 %v1304
  %1347 = vmatprep.subr.mxu0 0.0
  %1348 = vmatpush1.msra.mxu0 %v1303
  %1349 = vmatprep.subr.mxu0 0.0
  %1350 = vmatpush1.msra.mxu0 %v1302
  %1351 = vmatprep.subr.mxu0 0.0
  %1352 = vmatpush2.msra.mxu0 0.0
  %1353 = vmatprep.subr.mxu0 0.0
  %1354 = vmatpush2.msra.mxu0 0.0
  %1355 = vmatprep.subr.mxu0 0.0
  %1356 = vmatpush2.msra.mxu0 0.0
  %1357 = vmatprep.subr.mxu0 0.0
  %1358 = vmatpush2.msra.mxu0 0.0
  %1359 = vmatprep.subr.mxu0 0.0
  %1360 = vmatpush2.msra.mxu0 0.0
  %1361 = vmatprep.subr.mxu0 0.0
  %1362 = vmatpush2.msra.mxu0 0.0
  %1363 = vmatprep.subr.mxu0 0.0
  %1364 = vmatpush2.msra.mxu0 0.0
  %1365 = vmatprep.subr.mxu0 0.0
  %1366 = vmatpush2.msra.mxu0 0.0
  %1367 = vmatprep.subr.mxu0 0.0
  %1368 = vmatpush2.msra.mxu0 0.0
  %1369 = vmatprep.subr.mxu0 0.0
  %1370 = vmatpush2.msra.mxu0 0.0
  %1371 = vmatprep.subr.mxu0 0.0
  %1372 = vmatpush2.msra.mxu0 0.0
  %1373 = vmatprep.subr.mxu0 0.0
  %1374 = vmatpush2.msra.mxu0 0.0
  %1375 = vmatprep.subr.mxu0 0.0
  %1376 = vmatpush2.msra.mxu0 0.0
  %1377 = vmatprep.subr.mxu0 0.0
  %1378 = vmatpush2.msra.mxu0 0.0
  %1379 = vmatprep.subr.mxu0 0.0
  %1380 = vmatpush2.msra.mxu0 0.0
  %1381 = vmatprep.subr.mxu0 0.0
  %1382 = vmatpush2.msra.mxu0 0.0
  %1383 = vmatprep.mubr.f32.mxu0 0.0
  %1384 = vmatmul.mubr.f32.gmra.mxu0 %v1317
  %v1385 = vpop.f32.mrf.mxu0
  %v1386 = vadd.f32 %v1314, %v1385
  %v1387 = vpop.f32.mrf.mxu0
  %1388 = vdwg.mxu0
  %v1389 = vadd.f32 %v1218, %v1386
  %v1390 = vld [vmem:[%s2 + $0x108] sm:$0x1]
  %v1391 = vld [vmem:[%s2 + $0x110] sm:$0x1]
  %v1392 = vsel %vm737, %v1389, 0.0
  %1393 = vadd.xlane.f32.xlu0 %v1392
  %v1394 = vpop.xlane.xlu0 %1393
  %v1395 = vmul.f32 %v1394, %v1198
  %v1396 = vsub.f32 %v1389, %v1395
  %v1397 = vmul.f32 %v1396, %v1396
  %v1398 = vsel %vm737, %v1397, 0.0
  %1399 = vadd.xlane.f32.xlu0 %v1398
  %v1400 = vpop.xlane.xlu0 %1399
  %v1401 = vmul.f32 %v1400, %v1198
  %v1402 = vadd.f32 %v1401, 1e-05
  %v1403 = vrsqrt.pop %v1402
  %v1404 = vmul.f32 %v1396, %v1403
  %v1405 = vlaneseq
  %v1406 = vshrl.u32 %v1405, 7
  %v1407 = vsub.s32 0, %v1406
  %v1408 = vrot.slane %v1390, %v1407
  %v1409 = vmul.f32 %v1404, %v1408
  %v1410 = vlaneseq
  %v1411 = vshrl.u32 %v1410, 7
  %v1412 = vsub.s32 0, %v1411
  %v1413 = vrot.slane %v1391, %v1412
  %v1414 = vadd.f32 %v1409, %v1413
  %v1415 = vld [vmem:[%s2 + $0x118] sm:$0xff]
  %v1416 = vld [vmem:[%s2 + $0x120] sm:$0xff]
  %v1417 = vld [vmem:[%s2 + $0x128] sm:$0xff]
  %v1418 = vld [vmem:[%s2 + $0x130] sm:$0xff]
  %v1419 = vld [vmem:[%s2 + $0x138] sm:$0x1]
  %v1420 = vlaneseq
  %v1421 = vshrl.u32 %v1420, 7
  %v1422 = vsub.s32 0, %v1421
  %v1423 = vrot.slane %v1419, %v1422
  %v1425 = vsel %vm737, %v1414, 0
  %1427 = vmatprep.subr.mxu0 0.0
  %1428 = vmatpush1.msra.mxu0 0.0
  %1429 = vmatprep.subr.mxu0 0.0
  %1430 = vmatpush1.msra.mxu0 0.0
  %1431 = vmatprep.subr.mxu0 0.0
  %1432 = vmatpush1.msra.mxu0 0.0
  %1433 = vmatprep.subr.mxu0 0.0
  %1434 = vmatpush1.msra.mxu0 0.0
  %1435 = vmatprep.subr.mxu0 0.0
  %1436 = vmatpush1.msra.mxu0 0.0
  %1437 = vmatprep.subr.mxu0 0.0
  %1438 = vmatpush1.msra.mxu0 0.0
  %1439 = vmatprep.subr.mxu0 0.0
  %1440 = vmatpush1.msra.mxu0 0.0
  %1441 = vmatprep.subr.mxu0 0.0
  %1442 = vmatpush1.msra.mxu0 0.0
  %1443 = vmatprep.subr.mxu0 0.0
  %1444 = vmatpush1.msra.mxu0 0.0
  %1445 = vmatprep.subr.mxu0 0.0
  %1446 = vmatpush1.msra.mxu0 0.0
  %1447 = vmatprep.subr.mxu0 0.0
  %1448 = vmatpush1.msra.mxu0 0.0
  %1449 = vmatprep.subr.mxu0 0.0
  %1450 = vmatpush1.msra.mxu0 0.0
  %1451 = vmatprep.subr.mxu0 0.0
  %1452 = vmatpush1.msra.mxu0 %v1418
  %1453 = vmatprep.subr.mxu0 0.0
  %1454 = vmatpush1.msra.mxu0 %v1417
  %1455 = vmatprep.subr.mxu0 0.0
  %1456 = vmatpush1.msra.mxu0 %v1416
  %1457 = vmatprep.subr.mxu0 0.0
  %1458 = vmatpush1.msra.mxu0 %v1415
  %1459 = vmatprep.subr.mxu0 0.0
  %1460 = vmatpush2.msra.mxu0 0.0
  %1461 = vmatprep.subr.mxu0 0.0
  %1462 = vmatpush2.msra.mxu0 0.0
  %1463 = vmatprep.subr.mxu0 0.0
  %1464 = vmatpush2.msra.mxu0 0.0
  %1465 = vmatprep.subr.mxu0 0.0
  %1466 = vmatpush2.msra.mxu0 0.0
  %1467 = vmatprep.subr.mxu0 0.0
  %1468 = vmatpush2.msra.mxu0 0.0
  %1469 = vmatprep.subr.mxu0 0.0
  %1470 = vmatpush2.msra.mxu0 0.0
  %1471 = vmatprep.subr.mxu0 0.0
  %1472 = vmatpush2.msra.mxu0 0.0
  %1473 = vmatprep.subr.mxu0 0.0
  %1474 = vmatpush2.msra.mxu0 0.0
  %1475 = vmatprep.subr.mxu0 0.0
  %1476 = vmatpush2.msra.mxu0 0.0
  %1477 = vmatprep.subr.mxu0 0.0
  %1478 = vmatpush2.msra.mxu0 0.0
  %1479 = vmatprep.subr.mxu0 0.0
  %1480 = vmatpush2.msra.mxu0 0.0
  %1481 = vmatprep.subr.mxu0 0.0
  %1482 = vmatpush2.msra.mxu0 0.0
  %1483 = vmatprep.subr.mxu0 0.0
  %1484 = vmatpush2.msra.mxu0 0.0
  %1485 = vmatprep.subr.mxu0 0.0
  %1486 = vmatpush2.msra.mxu0 0.0
  %1487 = vmatprep.subr.mxu0 0.0
  %1488 = vmatpush2.msra.mxu0 0.0
  %1489 = vmatprep.subr.mxu0 0.0
  %1490 = vmatpush2.msra.mxu0 0.0
  %1491 = vmatprep.mubr.f32.mxu0 0.0
  %1492 = vmatmul.mubr.f32.gmra.mxu0 %v1425
  %v1493 = vpop.f32.mrf.mxu0
  %v1494 = vadd.f32 %v1423, %v1493
  %v1495 = vpop.f32.mrf.mxu0
  %1496 = vdwg.mxu0
  %v1497 = vmul.f32 %v1494, %v816
  %v1498 = vmul.f32 %v1494, %v818
  %v1499 = vmul.f32 %v1494, %v820
  %v1500 = vmul.f32 %v1494, %v822
  %v1501 = vmul.f32 %v1494, %v832
  %v1502 = vmul.f32 %v1494, %v834
  %v1503 = vmul.f32 %v1494, %v836
  %v1504 = vmul.f32 %v1494, %v838
  %1509 = vrot.lane.b32.xlu0 %v1497, 96
  %v1510 = vpop.permute.xlu0 %1509
  %1511 = vrot.lane.b32.xlu0 %v1498, 96
  %v1512 = vpop.permute.xlu0 %1511
  %1513 = vrot.lane.b32.xlu0 %v1499, 96
  %v1514 = vpop.permute.xlu0 %1513
  %1515 = vrot.lane.b32.xlu0 %v1500, 96
  %v1516 = vpop.permute.xlu0 %1515
  %v1518 = vsel %vm737, %v1494, 0
  %v1520 = vsel %vm737, %v1510, 0
  %v1522 = vsel %vm737, %v1512, 0
  %v1524 = vsel %vm737, %v1514, 0
  %v1526 = vsel %vm737, %v1516, 0
  %1528 = vmatprep.subr.mxu0 0.0
  %1529 = vmatpush1.xpose.msra.mxu0 0.0
  %1530 = vmatprep.subr.mxu0 0.0
  %1531 = vmatpush1.xpose.msra.mxu0 0.0
  %1532 = vmatprep.subr.mxu0 0.0
  %1533 = vmatpush1.xpose.msra.mxu0 0.0
  %1534 = vmatprep.subr.mxu0 0.0
  %1535 = vmatpush1.xpose.msra.mxu0 0.0
  %1536 = vmatprep.subr.mxu0 0.0
  %1537 = vmatpush1.xpose.msra.mxu0 0.0
  %1538 = vmatprep.subr.mxu0 0.0
  %1539 = vmatpush1.xpose.msra.mxu0 0.0
  %1540 = vmatprep.subr.mxu0 0.0
  %1541 = vmatpush1.xpose.msra.mxu0 0.0
  %1542 = vmatprep.subr.mxu0 0.0
  %1543 = vmatpush1.xpose.msra.mxu0 0.0
  %1544 = vmatprep.subr.mxu0 0.0
  %1545 = vmatpush1.xpose.msra.mxu0 0.0
  %1546 = vmatprep.subr.mxu0 0.0
  %1547 = vmatpush1.xpose.msra.mxu0 0.0
  %1548 = vmatprep.subr.mxu0 0.0
  %1549 = vmatpush1.xpose.msra.mxu0 0.0
  %1550 = vmatprep.subr.mxu0 0.0
  %1551 = vmatpush1.xpose.msra.mxu0 0.0
  %1552 = vmatprep.subr.mxu0 0.0
  %1553 = vmatpush1.xpose.msra.mxu0 %v1526
  %1554 = vmatprep.subr.mxu0 0.0
  %1555 = vmatpush1.xpose.msra.mxu0 %v1524
  %1556 = vmatprep.subr.mxu0 0.0
  %1557 = vmatpush1.xpose.msra.mxu0 %v1522
  %1558 = vmatprep.subr.mxu0 0.0
  %1559 = vmatpush1.xpose.msra.mxu0 %v1520
  %1560 = vmatprep.subr.mxu0 0.0
  %1561 = vmatpush2.xpose.msra.mxu0 0.0
  %1562 = vmatprep.subr.mxu0 0.0
  %1563 = vmatpush2.xpose.msra.mxu0 0.0
  %1564 = vmatprep.subr.mxu0 0.0
  %1565 = vmatpush2.xpose.msra.mxu0 0.0
  %1566 = vmatprep.subr.mxu0 0.0
  %1567 = vmatpush2.xpose.msra.mxu0 0.0
  %1568 = vmatprep.subr.mxu0 0.0
  %1569 = vmatpush2.xpose.msra.mxu0 0.0
  %1570 = vmatprep.subr.mxu0 0.0
  %1571 = vmatpush2.xpose.msra.mxu0 0.0
  %1572 = vmatprep.subr.mxu0 0.0
  %1573 = vmatpush2.xpose.msra.mxu0 0.0
  %1574 = vmatprep.subr.mxu0 0.0
  %1575 = vmatpush2.xpose.msra.mxu0 0.0
  %1576 = vmatprep.subr.mxu0 0.0
  %1577 = vmatpush2.xpose.msra.mxu0 0.0
  %1578 = vmatprep.subr.mxu0 0.0
  %1579 = vmatpush2.xpose.msra.mxu0 0.0
  %1580 = vmatprep.subr.mxu0 0.0
  %1581 = vmatpush2.xpose.msra.mxu0 0.0
  %1582 = vmatprep.subr.mxu0 0.0
  %1583 = vmatpush2.xpose.msra.mxu0 0.0
  %1584 = vmatprep.subr.mxu0 0.0
  %1585 = vmatpush2.xpose.msra.mxu0 0.0
  %1586 = vmatprep.subr.mxu0 0.0
  %1587 = vmatpush2.xpose.msra.mxu0 0.0
  %1588 = vmatprep.subr.mxu0 0.0
  %1589 = vmatpush2.xpose.msra.mxu0 0.0
  %1590 = vmatprep.subr.mxu0 0.0
  %1591 = vmatpush2.xpose.msra.mxu0 0.0
  %1592 = vmatprep.mubr.f32.mxu0 0.0
  %1593 = vmatmul.mubr.f32.gmra.mxu0 %v1518
  %v1594 = vpop.f32.mrf.mxu0
  %v1595 = vadd.f32 0.0, %v1594
  %v1596 = vpop.f32.mrf.mxu0
  %1597 = vdwg.mxu0
  %v1598 = vsel %vm737, %v1595, -inf
  %1599 = vmax.xlane.f32.xlu0 %v1598
  %v1600 = vpop.xlane.xlu0 %1599
  %v1601 = vsub.f32 %v1595, %v1600
  %v1602 = vmul.f32 %v1601, 1.442695
  %v1603 = vpow.pop %v1602
  %v1605 = vsel %vm737, %v1603, 0
  %1607 = vmatprep.subr.mxu0 0.0
  %1608 = vmatpush1.msra.mxu0 0.0
  %1609 = vmatprep.subr.mxu0 0.0
  %1610 = vmatpush1.msra.mxu0 0.0
  %1611 = vmatprep.subr.mxu0 0.0
  %1612 = vmatpush1.msra.mxu0 0.0
  %1613 = vmatprep.subr.mxu0 0.0
  %1614 = vmatpush1.msra.mxu0 0.0
  %1615 = vmatprep.subr.mxu0 0.0
  %1616 = vmatpush1.msra.mxu0 0.0
  %1617 = vmatprep.subr.mxu0 0.0
  %1618 = vmatpush1.msra.mxu0 0.0
  %1619 = vmatprep.subr.mxu0 0.0
  %1620 = vmatpush1.msra.mxu0 0.0
  %1621 = vmatprep.subr.mxu0 0.0
  %1622 = vmatpush1.msra.mxu0 0.0
  %1623 = vmatprep.subr.mxu0 0.0
  %1624 = vmatpush1.msra.mxu0 0.0
  %1625 = vmatprep.subr.mxu0 0.0
  %1626 = vmatpush1.msra.mxu0 0.0
  %1627 = vmatprep.subr.mxu0 0.0
  %1628 = vmatpush1.msra.mxu0 0.0
  %1629 = vmatprep.subr.mxu0 0.0
  %1630 = vmatpush1.msra.mxu0 0.0
  %1631 = vmatprep.subr.mxu0 0.0
  %1632 = vmatpush1.msra.mxu0 %v727
  %1633 = vmatprep.subr.mxu0 0.0
  %1634 = vmatpush1.msra.mxu0 %v726
  %1635 = vmatprep.subr.mxu0 0.0
  %1636 = vmatpush1.msra.mxu0 %v725
  %1637 = vmatprep.subr.mxu0 0.0
  %1638 = vmatpush1.msra.mxu0 %v724
  %1639 = vmatprep.subr.mxu0 0.0
  %1640 = vmatpush2.msra.mxu0 0.0
  %1641 = vmatprep.subr.mxu0 0.0
  %1642 = vmatpush2.msra.mxu0 0.0
  %1643 = vmatprep.subr.mxu0 0.0
  %1644 = vmatpush2.msra.mxu0 0.0
  %1645 = vmatprep.subr.mxu0 0.0
  %1646 = vmatpush2.msra.mxu0 0.0
  %1647 = vmatprep.subr.mxu0 0.0
  %1648 = vmatpush2.msra.mxu0 0.0
  %1649 = vmatprep.subr.mxu0 0.0
  %1650 = vmatpush2.msra.mxu0 0.0
  %1651 = vmatprep.subr.mxu0 0.0
  %1652 = vmatpush2.msra.mxu0 0.0
  %1653 = vmatprep.subr.mxu0 0.0
  %1654 = vmatpush2.msra.mxu0 0.0
  %1655 = vmatprep.subr.mxu0 0.0
  %1656 = vmatpush2.msra.mxu0 0.0
  %1657 = vmatprep.subr.mxu0 0.0
  %1658 = vmatpush2.msra.mxu0 0.0
  %1659 = vmatprep.subr.mxu0 0.0
  %1660 = vmatpush2.msra.mxu0 0.0
  %1661 = vmatprep.subr.mxu0 0.0
  %1662 = vmatpush2.msra.mxu0 0.0
  %1663 = vmatprep.subr.mxu0 0.0
  %1664 = vmatpush2.msra.mxu0 0.0
  %1665 = vmatprep.subr.mxu0 0.0
  %1666 = vmatpush2.msra.mxu0 0.0
  %1667 = vmatprep.subr.mxu0 0.0
  %1668 = vmatpush2.msra.mxu0 0.0
  %1669 = vmatprep.subr.mxu0 0.0
  %1670 = vmatpush2.msra.mxu0 0.0
  %1671 = vmatprep.mubr.f32.mxu0 0.0
  %1672 = vmatmul.mubr.f32.gmra.mxu0 %v1605
  %v1673 = vpop.f32.mrf.mxu0
  %v1674 = vadd.f32 0.0, %v1673
  %v1675 = vpop.f32.mrf.mxu0
  %1676 = vdwg.mxu0
  %v1677 = vrcp.pop %v1674
  %v1678 = vmul.f32 %v1603, %v1677
  %1683 = vrot.lane.b32.xlu0 %v1501, 64
  %v1684 = vpop.permute.xlu0 %1683
  %1685 = vrot.lane.b32.xlu0 %v1502, 64
  %v1686 = vpop.permute.xlu0 %1685
  %1687 = vrot.lane.b32.xlu0 %v1503, 64
  %v1688 = vpop.permute.xlu0 %1687
  %1689 = vrot.lane.b32.xlu0 %v1504, 64
  %v1690 = vpop.permute.xlu0 %1689
  %v1696 = vsel %vm737, %v1678, 0
  %1698 = vmatprep.subr.mxu0 0.0
  %1699 = vmatpush1.msra.mxu0 0.0
  %1700 = vmatprep.subr.mxu0 0.0
  %1701 = vmatpush1.msra.mxu0 0.0
  %1702 = vmatprep.subr.mxu0 0.0
  %1703 = vmatpush1.msra.mxu0 0.0
  %1704 = vmatprep.subr.mxu0 0.0
  %1705 = vmatpush1.msra.mxu0 0.0
  %1706 = vmatprep.subr.mxu0 0.0
  %1707 = vmatpush1.msra.mxu0 0.0
  %1708 = vmatprep.subr.mxu0 0.0
  %1709 = vmatpush1.msra.mxu0 0.0
  %1710 = vmatprep.subr.mxu0 0.0
  %1711 = vmatpush1.msra.mxu0 0.0
  %1712 = vmatprep.subr.mxu0 0.0
  %1713 = vmatpush1.msra.mxu0 0.0
  %1714 = vmatprep.subr.mxu0 0.0
  %1715 = vmatpush1.msra.mxu0 0.0
  %1716 = vmatprep.subr.mxu0 0.0
  %1717 = vmatpush1.msra.mxu0 0.0
  %1718 = vmatprep.subr.mxu0 0.0
  %1719 = vmatpush1.msra.mxu0 0.0
  %1720 = vmatprep.subr.mxu0 0.0
  %1721 = vmatpush1.msra.mxu0 0.0
  %1722 = vmatprep.subr.mxu0 0.0
  %1723 = vmatpush1.msra.mxu0 %v1690
  %1724 = vmatprep.subr.mxu0 0.0
  %1725 = vmatpush1.msra.mxu0 %v1688
  %1726 = vmatprep.subr.mxu0 0.0
  %1727 = vmatpush1.msra.mxu0 %v1686
  %1728 = vmatprep.subr.mxu0 0.0
  %1729 = vmatpush1.msra.mxu0 %v1684
  %1730 = vmatprep.subr.mxu0 0.0
  %1731 = vmatpush2.msra.mxu0 0.0
  %1732 = vmatprep.subr.mxu0 0.0
  %1733 = vmatpush2.msra.mxu0 0.0
  %1734 = vmatprep.subr.mxu0 0.0
  %1735 = vmatpush2.msra.mxu0 0.0
  %1736 = vmatprep.subr.mxu0 0.0
  %1737 = vmatpush2.msra.mxu0 0.0
  %1738 = vmatprep.subr.mxu0 0.0
  %1739 = vmatpush2.msra.mxu0 0.0
  %1740 = vmatprep.subr.mxu0 0.0
  %1741 = vmatpush2.msra.mxu0 0.0
  %1742 = vmatprep.subr.mxu0 0.0
  %1743 = vmatpush2.msra.mxu0 0.0
  %1744 = vmatprep.subr.mxu0 0.0
  %1745 = vmatpush2.msra.mxu0 0.0
  %1746 = vmatprep.subr.mxu0 0.0
  %1747 = vmatpush2.msra.mxu0 0.0
  %1748 = vmatprep.subr.mxu0 0.0
  %1749 = vmatpush2.msra.mxu0 0.0
  %1750 = vmatprep.subr.mxu0 0.0
  %1751 = vmatpush2.msra.mxu0 0.0
  %1752 = vmatprep.subr.mxu0 0.0
  %1753 = vmatpush2.msra.mxu0 0.0
  %1754 = vmatprep.subr.mxu0 0.0
  %1755 = vmatpush2.msra.mxu0 0.0
  %1756 = vmatprep.subr.mxu0 0.0
  %1757 = vmatpush2.msra.mxu0 0.0
  %1758 = vmatprep.subr.mxu0 0.0
  %1759 = vmatpush2.msra.mxu0 0.0
  %1760 = vmatprep.subr.mxu0 0.0
  %1761 = vmatpush2.msra.mxu0 0.0
  %1762 = vmatprep.mubr.f32.mxu0 0.0
  %1763 = vmatmul.mubr.f32.gmra.mxu0 %v1696
  %v1764 = vpop.f32.mrf.mxu0
  %v1765 = vadd.f32 0.0, %v1764
  %v1766 = vpop.f32.mrf.mxu0
  %1767 = vdwg.mxu0
  %v1768 = vld [vmem:[%s2 + $0x140] sm:$0xff]
  %v1769 = vld [vmem:[%s2 + $0x148] sm:$0xff]
  %v1770 = vld [vmem:[%s2 + $0x150] sm:$0xff]
  %v1771 = vld [vmem:[%s2 + $0x158] sm:$0xff]
  %v1772 = vld [vmem:[%s2 + $0x160] sm:$0x1]
  %v1773 = vlaneseq
  %v1774 = vshrl.u32 %v1773, 7
  %v1775 = vsub.s32 0, %v1774
  %v1776 = vrot.slane %v1772, %v1775
  %v1778 = vsel %vm737, %v1765, 0
  %1780 = vmatprep.subr.mxu0 0.0
  %1781 = vmatpush1.msra.mxu0 0.0
  %1782 = vmatprep.subr.mxu0 0.0
  %1783 = vmatpush1.msra.mxu0 0.0
  %1784 = vmatprep.subr.mxu0 0.0
  %1785 = vmatpush1.msra.mxu0 0.0
  %1786 = vmatprep.subr.mxu0 0.0
  %1787 = vmatpush1.msra.mxu0 0.0
  %1788 = vmatprep.subr.mxu0 0.0
  %1789 = vmatpush1.msra.mxu0 0.0
  %1790 = vmatprep.subr.mxu0 0.0
  %1791 = vmatpush1.msra.mxu0 0.0
  %1792 = vmatprep.subr.mxu0 0.0
  %1793 = vmatpush1.msra.mxu0 0.0
  %1794 = vmatprep.subr.mxu0 0.0
  %1795 = vmatpush1.msra.mxu0 0.0
  %1796 = vmatprep.subr.mxu0 0.0
  %1797 = vmatpush1.msra.mxu0 0.0
  %1798 = vmatprep.subr.mxu0 0.0
  %1799 = vmatpush1.msra.mxu0 0.0
  %1800 = vmatprep.subr.mxu0 0.0
  %1801 = vmatpush1.msra.mxu0 0.0
  %1802 = vmatprep.subr.mxu0 0.0
  %1803 = vmatpush1.msra.mxu0 0.0
  %1804 = vmatprep.subr.mxu0 0.0
  %1805 = vmatpush1.msra.mxu0 %v1771
  %1806 = vmatprep.subr.mxu0 0.0
  %1807 = vmatpush1.msra.mxu0 %v1770
  %1808 = vmatprep.subr.mxu0 0.0
  %1809 = vmatpush1.msra.mxu0 %v1769
  %1810 = vmatprep.subr.mxu0 0.0
  %1811 = vmatpush1.msra.mxu0 %v1768
  %1812 = vmatprep.subr.mxu0 0.0
  %1813 = vmatpush2.msra.mxu0 0.0
  %1814 = vmatprep.subr.mxu0 0.0
  %1815 = vmatpush2.msra.mxu0 0.0
  %1816 = vmatprep.subr.mxu0 0.0
  %1817 = vmatpush2.msra.mxu0 0.0
  %1818 = vmatprep.subr.mxu0 0.0
  %1819 = vmatpush2.msra.mxu0 0.0
  %1820 = vmatprep.subr.mxu0 0.0
  %1821 = vmatpush2.msra.mxu0 0.0
  %1822 = vmatprep.subr.mxu0 0.0
  %1823 = vmatpush2.msra.mxu0 0.0
  %1824 = vmatprep.subr.mxu0 0.0
  %1825 = vmatpush2.msra.mxu0 0.0
  %1826 = vmatprep.subr.mxu0 0.0
  %1827 = vmatpush2.msra.mxu0 0.0
  %1828 = vmatprep.subr.mxu0 0.0
  %1829 = vmatpush2.msra.mxu0 0.0
  %1830 = vmatprep.subr.mxu0 0.0
  %1831 = vmatpush2.msra.mxu0 0.0
  %1832 = vmatprep.subr.mxu0 0.0
  %1833 = vmatpush2.msra.mxu0 0.0
  %1834 = vmatprep.subr.mxu0 0.0
  %1835 = vmatpush2.msra.mxu0 0.0
  %1836 = vmatprep.subr.mxu0 0.0
  %1837 = vmatpush2.msra.mxu0 0.0
  %1838 = vmatprep.subr.mxu0 0.0
  %1839 = vmatpush2.msra.mxu0 0.0
  %1840 = vmatprep.subr.mxu0 0.0
  %1841 = vmatpush2.msra.mxu0 0.0
  %1842 = vmatprep.subr.mxu0 0.0
  %1843 = vmatpush2.msra.mxu0 0.0
  %1844 = vmatprep.mubr.f32.mxu0 0.0
  %1845 = vmatmul.mubr.f32.gmra.mxu0 %v1778
  %v1846 = vpop.f32.mrf.mxu0
  %v1847 = vadd.f32 %v1776, %v1846
  %v1848 = vpop.f32.mrf.mxu0
  %1849 = vdwg.mxu0
  %v1850 = vadd.f32 %v1414, %v1847
  %v1851 = vld [vmem:[%s2 + $0x168] sm:$0x1]
  %v1852 = vld [vmem:[%s2 + $0x170] sm:$0x1]
  %v1853 = vsel %vm737, %v1850, 0.0
  %1854 = vadd.xlane.f32.xlu0 %v1853
  %v1855 = vpop.xlane.xlu0 %1854
  %v1856 = vmul.f32 %v1855, %v1198
  %v1857 = vsub.f32 %v1850, %v1856
  %v1858 = vmul.f32 %v1857, %v1857
  %v1859 = vsel %vm737, %v1858, 0.0
  %1860 = vadd.xlane.f32.xlu0 %v1859
  %v1861 = vpop.xlane.xlu0 %1860
  %v1862 = vmul.f32 %v1861, %v1198
  %v1863 = vadd.f32 %v1862, 1e-05
  %v1864 = vrsqrt.pop %v1863
  %v1865 = vmul.f32 %v1857, %v1864
  %v1866 = vlaneseq
  %v1867 = vshrl.u32 %v1866, 7
  %v1868 = vsub.s32 0, %v1867
  %v1869 = vrot.slane %v1851, %v1868
  %v1870 = vmul.f32 %v1865, %v1869
  %v1871 = vlaneseq
  %v1872 = vshrl.u32 %v1871, 7
  %v1873 = vsub.s32 0, %v1872
  %v1874 = vrot.slane %v1852, %v1873
  %v1875 = vadd.f32 %v1870, %v1874
  %v1876 = vld [vmem:[%s2 + $0x178] sm:$0xff]
  %v1877 = vld [vmem:[%s2 + $0x180] sm:$0xff]
  %v1878 = vld [vmem:[%s2 + $0x188] sm:$0xff]
  %v1879 = vld [vmem:[%s2 + $0x190] sm:$0xff]
  %v1880 = vld [vmem:[%s2 + $0x198] sm:$0x1]
  %v1881 = vlaneseq
  %v1882 = vshrl.u32 %v1881, 7
  %v1883 = vsub.s32 0, %v1882
  %v1884 = vrot.slane %v1880, %v1883
  %v1886 = vsel %vm737, %v1875, 0
  %1888 = vmatprep.subr.mxu0 0.0
  %1889 = vmatpush1.msra.mxu0 0.0
  %1890 = vmatprep.subr.mxu0 0.0
  %1891 = vmatpush1.msra.mxu0 0.0
  %1892 = vmatprep.subr.mxu0 0.0
  %1893 = vmatpush1.msra.mxu0 0.0
  %1894 = vmatprep.subr.mxu0 0.0
  %1895 = vmatpush1.msra.mxu0 0.0
  %1896 = vmatprep.subr.mxu0 0.0
  %1897 = vmatpush1.msra.mxu0 0.0
  %1898 = vmatprep.subr.mxu0 0.0
  %1899 = vmatpush1.msra.mxu0 0.0
  %1900 = vmatprep.subr.mxu0 0.0
  %1901 = vmatpush1.msra.mxu0 0.0
  %1902 = vmatprep.subr.mxu0 0.0
  %1903 = vmatpush1.msra.mxu0 0.0
  %1904 = vmatprep.subr.mxu0 0.0
  %1905 = vmatpush1.msra.mxu0 0.0
  %1906 = vmatprep.subr.mxu0 0.0
  %1907 = vmatpush1.msra.mxu0 0.0
  %1908 = vmatprep.subr.mxu0 0.0
  %1909 = vmatpush1.msra.mxu0 0.0
  %1910 = vmatprep.subr.mxu0 0.0
  %1911 = vmatpush1.msra.mxu0 0.0
  %1912 = vmatprep.subr.mxu0 0.0
  %1913 = vmatpush1.msra.mxu0 %v1879
  %1914 = vmatprep.subr.mxu0 0.0
  %1915 = vmatpush1.msra.mxu0 %v1878
  %1916 = vmatprep.subr.mxu0 0.0
  %1917 = vmatpush1.msra.mxu0 %v1877
  %1918 = vmatprep.subr.mxu0 0.0
  %1919 = vmatpush1.msra.mxu0 %v1876
  %1920 = vmatprep.subr.mxu0 0.0
  %1921 = vmatpush2.msra.mxu0 0.0
  %1922 = vmatprep.subr.mxu0 0.0
  %1923 = vmatpush2.msra.mxu0 0.0
  %1924 = vmatprep.subr.mxu0 0.0
  %1925 = vmatpush2.msra.mxu0 0.0
  %1926 = vmatprep.subr.mxu0 0.0
  %1927 = vmatpush2.msra.mxu0 0.0
  %1928 = vmatprep.subr.mxu0 0.0
  %1929 = vmatpush2.msra.mxu0 0.0
  %1930 = vmatprep.subr.mxu0 0.0
  %1931 = vmatpush2.msra.mxu0 0.0
  %1932 = vmatprep.subr.mxu0 0.0
  %1933 = vmatpush2.msra.mxu0 0.0
  %1934 = vmatprep.subr.mxu0 0.0
  %1935 = vmatpush2.msra.mxu0 0.0
  %1936 = vmatprep.subr.mxu0 0.0
  %1937 = vmatpush2.msra.mxu0 0.0
  %1938 = vmatprep.subr.mxu0 0.0
  %1939 = vmatpush2.msra.mxu0 0.0
  %1940 = vmatprep.subr.mxu0 0.0
  %1941 = vmatpush2.msra.mxu0 0.0
  %1942 = vmatprep.subr.mxu0 0.0
  %1943 = vmatpush2.msra.mxu0 0.0
  %1944 = vmatprep.subr.mxu0 0.0
  %1945 = vmatpush2.msra.mxu0 0.0
  %1946 = vmatprep.subr.mxu0 0.0
  %1947 = vmatpush2.msra.mxu0 0.0
  %1948 = vmatprep.subr.mxu0 0.0
  %1949 = vmatpush2.msra.mxu0 0.0
  %1950 = vmatprep.subr.mxu0 0.0
  %1951 = vmatpush2.msra.mxu0 0.0
  %1952 = vmatprep.mubr.f32.mxu0 0.0
  %1953 = vmatmul.mubr.f32.gmra.mxu0 %v1886
  %v1954 = vpop.f32.mrf.mxu0
  %v1955 = vadd.f32 %v1884, %v1954
  %v1956 = vpop.f32.mrf.mxu0
  %1957 = vdwg.mxu0
  %v1958 = vmax.f32 %v1955, 0.0
  %v1959 = vld [vmem:[%s2 + $0x1a0] sm:$0xff]
  %v1960 = vld [vmem:[%s2 + $0x1a8] sm:$0xff]
  %v1961 = vld [vmem:[%s2 + $0x1b0] sm:$0xff]
  %v1962 = vld [vmem:[%s2 + $0x1b8] sm:$0xff]
  %v1963 = vld [vmem:[%s2 + $0x1c0] sm:$0xff]
  %v1964 = vld [vmem:[%s2 + $0x1c8] sm:$0xff]
  %v1965 = vld [vmem:[%s2 + $0x1d0] sm:$0xff]
  %v1966 = vld [vmem:[%s2 + $0x1d8] sm:$0xff]
  %v1967 = vld [vmem:[%s2 + $0x1e0] sm:$0x1]
  %v1968 = vlaneseq
  %v1969 = vshrl.u32 %v1968, 7
  %v1970 = vsub.s32 0, %v1969
  %v1971 = vrot.slane %v1967, %v1970
  %v1973 = vsel %vm1315, %v1958, 0
  %1975 = vmatprep.subr.mxu0 0.0
  %1976 = vmatpush1.msra.mxu0 0.0
  %1977 = vmatprep.subr.mxu0 0.0
  %1978 = vmatpush1.msra.mxu0 0.0
  %1979 = vmatprep.subr.mxu0 0.0
  %1980 = vmatpush1.msra.mxu0 0.0
  %1981 = vmatprep.subr.mxu0 0.0
  %1982 = vmatpush1.msra.mxu0 0.0
  %1983 = vmatprep.subr.mxu0 0.0
  %1984 = vmatpush1.msra.mxu0 0.0
  %1985 = vmatprep.subr.mxu0 0.0
  %1986 = vmatpush1.msra.mxu0 0.0
  %1987 = vmatprep.subr.mxu0 0.0
  %1988 = vmatpush1.msra.mxu0 0.0
  %1989 = vmatprep.subr.mxu0 0.0
  %1990 = vmatpush1.msra.mxu0 0.0
  %1991 = vmatprep.subr.mxu0 0.0
  %1992 = vmatpush1.msra.mxu0 %v1966
  %1993 = vmatprep.subr.mxu0 0.0
  %1994 = vmatpush1.msra.mxu0 %v1965
  %1995 = vmatprep.subr.mxu0 0.0
  %1996 = vmatpush1.msra.mxu0 %v1964
  %1997 = vmatprep.subr.mxu0 0.0
  %1998 = vmatpush1.msra.mxu0 %v1963
  %1999 = vmatprep.subr.mxu0 0.0
  %2000 = vmatpush1.msra.mxu0 %v1962
  %2001 = vmatprep.subr.mxu0 0.0
  %2002 = vmatpush1.msra.mxu0 %v1961
  %2003 = vmatprep.subr.mxu0 0.0
  %2004 = vmatpush1.msra.mxu0 %v1960
  %2005 = vmatprep.subr.mxu0 0.0
  %2006 = vmatpush1.msra.mxu0 %v1959
  %2007 = vmatprep.subr.mxu0 0.0
  %2008 = vmatpush2.msra.mxu0 0.0
  %2009 = vmatprep.subr.mxu0 0.0
  %2010 = vmatpush2.msra.mxu0 0.0
  %2011 = vmatprep.subr.mxu0 0.0
  %2012 = vmatpush2.msra.mxu0 0.0
  %2013 = vmatprep.subr.mxu0 0.0
  %2014 = vmatpush2.msra.mxu0 0.0
  %2015 = vmatprep.subr.mxu0 0.0
  %2016 = vmatpush2.msra.mxu0 0.0
  %2017 = vmatprep.subr.mxu0 0.0
  %2018 = vmatpush2.msra.mxu0 0.0
  %2019 = vmatprep.subr.mxu0 0.0
  %2020 = vmatpush2.msra.mxu0 0.0
  %2021 = vmatprep.subr.mxu0 0.0
  %2022 = vmatpush2.msra.mxu0 0.0
  %2023 = vmatprep.subr.mxu0 0.0
  %2024 = vmatpush2.msra.mxu0 0.0
  %2025 = vmatprep.subr.mxu0 0.0
  %2026 = vmatpush2.msra.mxu0 0.0
  %2027 = vmatprep.subr.mxu0 0.0
  %2028 = vmatpush2.msra.mxu0 0.0
  %2029 = vmatprep.subr.mxu0 0.0
  %2030 = vmatpush2.msra.mxu0 0.0
  %2031 = vmatprep.subr.mxu0 0.0
  %2032 = vmatpush2.msra.mxu0 0.0
  %2033 = vmatprep.subr.mxu0 0.0
  %2034 = vmatpush2.msra.mxu0 0.0
  %2035 = vmatprep.subr.mxu0 0.0
  %2036 = vmatpush2.msra.mxu0 0.0
  %2037 = vmatprep.subr.mxu0 0.0
  %2038 = vmatpush2.msra.mxu0 0.0
  %2039 = vmatprep.mubr.f32.mxu0 0.0
  %2040 = vmatmul.mubr.f32.gmra.mxu0 %v1973
  %v2041 = vpop.f32.mrf.mxu0
  %v2042 = vadd.f32 %v1971, %v2041
  %v2043 = vpop.f32.mrf.mxu0
  %2044 = vdwg.mxu0
  %v2045 = vadd.f32 %v1875, %v2042
  %v2046 = vld [vmem:[%s2 + $0x1e8] sm:$0x1]
  %v2047 = vld [vmem:[%s2 + $0x1f0] sm:$0x1]
  %v2048 = vsel %vm737, %v2045, 0.0
  %2049 = vadd.xlane.f32.xlu0 %v2048
  %v2050 = vpop.xlane.xlu0 %2049
  %v2051 = vmul.f32 %v2050, %v1198
  %v2052 = vsub.f32 %v2045, %v2051
  %v2053 = vmul.f32 %v2052, %v2052
  %v2054 = vsel %vm737, %v2053, 0.0
  %2055 = vadd.xlane.f32.xlu0 %v2054
  %v2056 = vpop.xlane.xlu0 %2055
  %v2057 = vmul.f32 %v2056, %v1198
  %v2058 = vadd.f32 %v2057, 1e-05
  %v2059 = vrsqrt.pop %v2058
  %v2060 = vmul.f32 %v2052, %v2059
  %v2061 = vlaneseq
  %v2062 = vshrl.u32 %v2061, 7
  %v2063 = vsub.s32 0, %v2062
  %v2064 = vrot.slane %v2046, %v2063
  %v2065 = vmul.f32 %v2060, %v2064
  %v2066 = vlaneseq
  %v2067 = vshrl.u32 %v2066, 7
  %v2068 = vsub.s32 0, %v2067
  %v2069 = vrot.slane %v2047, %v2068
  %v2070 = vadd.f32 %v2065, %v2069
  %v2071 = vsel %vm737, %v2070, 0.0
  %v2072 = vrot.slane %v2071, 4
  %v2073 = vadd.f32 %v2071, %v2072
  %v2074 = vrot.slane %v2073, 2
  %v2075 = vadd.f32 %v2073, %v2074
  %v2076 = vrot.slane %v2075, 1
  %v2077 = vadd.f32 %v2075, %v2076
  %v2078 = vrcp.pop 8.0
  %v2079 = vmul.f32 %v2077, %v2078
  %v2080 = vld [vmem:[%s2 + $0x8] sm:$0x1]
  %v2081 = vmul.f32 %v2079, %v2080
  %vm2082 = vcmask 253952
  %v2083 = vsel %vm2082, %v2081, 0.0
  %2084 = vadd.xlane.f32.xlu0 %v2083
  %v2085 = vpop.xlane.xlu0 %2084
  %v2086 = vld [vmem:[%s2 + $0x10] sm:$0x1]
  %v2087 = vadd.f32 %v2085, %v2086
  %s2089 = vtos %v2087
  %v2090 = vstv %s2089
  %2092 = vst [vmem:[%s3] sm:$0xff] %v2090
  // Predicated region
  $region14: #{combined_model_forward.1} parent=0 // pred_check
    _
  $region15: #{combined_model_forward.1} parent=0 // pred_check_branch
    %2094 = sbr.rel (0) target = $region17
  $region16: #{combined_model_forward.1} parent=0 // pred_region
    _
  $region17: #{combined_model_forward.1} parent=0 // pred_fallthru
    _
  // Predicated region
  $region18: #{combined_model_forward.1} parent=0 // pred_check
    _
  $region19: #{combined_model_forward.1} parent=0 // pred_check_branch
    %2096 = sbr.rel (0) target = $region21
  $region20: #{combined_model_forward.1} parent=0 // pred_region
    _
  $region21: #{combined_model_forward.1} parent=0 // pred_fallthru
    _

</llo_original>
